<compile_context>
chip_gen: v7x
topology: tpu7x:2x2x1
jax: 0.10.0
libtpu: 0.0.40
codegen_flags: <defaults>
</compile_context>

<pallas_src>
import jax
import jax.numpy as jnp
import numpy as np
from jax import lax
from jax.experimental import pallas as pl
from jax.experimental.pallas import tpu as pltpu

INPUT_DIM = 6            # input_dim
WIDTH = 32               # layer_width
NUM_LAYERS = 4           # num_layers (DenseBlock depth)
PACK = 4                 # batch rows folded into the lane axis
PW = PACK * WIDTH        # 128 lanes
SOFTPLUS_THRESHOLD = 20.0  # torch.nn.Softplus(beta=1, threshold=20)


def _softplus(x):
    # torch semantics: x if x > threshold else log(1 + exp(x))
    return jnp.where(
        x > SOFTPLUS_THRESHOLD,
        x,
        jnp.log1p(jnp.exp(jnp.minimum(x, SOFTPLUS_THRESHOLD))),
    )


# ---------------------------------------------------------------------------
# Shared kernel body: lane-packed forward, returns the per-element contribution
# slab (tbp, 128) in f32, where slab[p, 32*s+c] = sum_j hs_j[4p+s, c]*w3[32j+c].
# ---------------------------------------------------------------------------
def _forward_packed(x_ref, w1_ref, b1_ref, wd_ref, bd_ref, w3_ref, cdt):
    x = x_ref[...].astype(cdt)                               # (tbp, 24)

    # layer1: Linear(6,32)+Softplus, 4-way block-diagonal in the lane axis
    h0 = _softplus(
        (jnp.dot(x, w1_ref[...], preferred_element_type=jnp.float32)
         + b1_ref[...]).astype(cdt))                         # (tbp, 128)

    # DenseBlock: layer i consumes [h0..h_i]; concatenation expressed as a sum
    # of block-diagonal 128x128 matmuls (statically unrolled, chunk counter).
    hs = [h0]
    chunk = 0
    for layer in range(NUM_LAYERS):
        z = bd_ref[layer]                                    # (1,128) f32, broadcasts
        for j in range(layer + 1):
            z = z + jnp.dot(hs[j], wd_ref[chunk],
                            preferred_element_type=jnp.float32)
            chunk += 1
        hs.append(_softplus(z.astype(cdt)))

    # final Linear(160,1) as VPU multiply against lane-tiled w3 rows
    slab = hs[0].astype(jnp.float32) * w3_ref[0]
    for j in range(1, NUM_LAYERS + 1):
        slab = slab + hs[j].astype(jnp.float32) * w3_ref[j]
    return slab                                              # (tbp, 128) f32


def _make_rows_kernel(cdt):
    def kernel(x_ref, w1_ref, b1_ref, wd_ref, bd_ref, w3_ref, o_ref):
        o_ref[...] = _forward_packed(x_ref, w1_ref, b1_ref, wd_ref, bd_ref,
                                     w3_ref, cdt)
    return kernel


def _make_fused_kernel(batch, tile_rows, cdt):
    # batch / tile_rows are static Python ints (closure), so the pad-row mask
    # needs no extra operands.
    def kernel(x_ref, w1_ref, b1_ref, wd_ref, bd_ref, w3_ref, o_ref):
        slab = _forward_packed(x_ref, w1_ref, b1_ref, wd_ref, bd_ref,
                               w3_ref, cdt)                  # (tbp, 128)
        # original row index of element (p, lane) = tile_off + 4*p + lane//32
        p_ids = lax.broadcasted_iota(jnp.int32, slab.shape, 0)
        lane_ids = lax.broadcasted_iota(jnp.int32, slab.shape, 1)
        row_ids = pl.program_id(0) * tile_rows + p_ids * PACK + lane_ids // WIDTH
        slab = jnp.where(row_ids < batch, slab, 0.0)
        # sublane reduce -> lane-dense (1,128) partial per grid step
        o_ref[...] = jnp.sum(slab, axis=0, keepdims=True).reshape(o_ref.shape)
    return kernel


# ---------------------------------------------------------------------------
# wrapper-side packing
# ---------------------------------------------------------------------------
def _pack_params(params, compute_dtype):
    eye = jnp.eye(PACK, dtype=jnp.float32)

    w1p = jnp.kron(eye, params["w1"].T.astype(jnp.float32))        # (24, 128)
    b1p = jnp.tile(params["b1"].astype(jnp.float32).reshape(1, WIDTH),
                   (1, PACK))                                       # (1, 128)

    wd_chunks = []
    for i in range(NUM_LAYERS):
        wt = params["dense_w"][i].T.astype(jnp.float32)             # (32*(i+1), 32)
        for j in range(i + 1):
            wd_chunks.append(jnp.kron(eye, wt[j * WIDTH:(j + 1) * WIDTH]))
    wdp = jnp.stack(wd_chunks, axis=0)                              # (10, 128, 128)
    bdp = jnp.stack([jnp.tile(b.astype(jnp.float32).reshape(1, WIDTH), (1, PACK))
                     for b in params["dense_b"]], axis=0)           # (4, 1, 128)

    w3t = params["w3"].astype(jnp.float32).reshape(-1)              # (160,)
    w3p = jnp.stack([jnp.tile(w3t[j * WIDTH:(j + 1) * WIDTH].reshape(1, WIDTH),
                              (1, PACK))
                     for j in range(NUM_LAYERS + 1)], axis=0)       # (5, 1, 128)

    # matmul operands optionally in bf16 (v6e/v7x); biases & w3 rows stay f32
    w1p = w1p.astype(compute_dtype)
    wdp = wdp.astype(compute_dtype)
    return w1p, b1p, wdp, bdp, w3p


def _choose_tb(batch, tb):
    tb = max(32, (int(tb) // 32) * 32)        # tb/4 must be a multiple of 8
    cap = ((batch + 31) // 32) * 32           # don't over-pad tiny batches
    return min(tb, cap)


def _prepare(x, params, tb, compute_dtype):
    B = x.shape[0]
    x = x.astype(jnp.float32)
    tb_eff = _choose_tb(B, tb)
    b_pad = pl.cdiv(B, tb_eff) * tb_eff
    if b_pad != B:
        x = jnp.pad(x, ((0, b_pad - B), (0, 0)))
    xp = x.reshape(b_pad // PACK, PACK * INPUT_DIM)                 # (Bp/4, 24)

    w1p, b1p, wdp, bdp, w3p = _pack_params(params, compute_dtype)
    tbp = tb_eff // PACK
    in_specs = [
        pl.BlockSpec((tbp, PACK * INPUT_DIM), lambda i: (i, 0)),
        pl.BlockSpec(w1p.shape, lambda i: (0, 0)),
        pl.BlockSpec(b1p.shape, lambda i: (0, 0)),
        pl.BlockSpec(wdp.shape, lambda i: (0, 0, 0)),
        pl.BlockSpec(bdp.shape, lambda i: (0, 0, 0)),
        pl.BlockSpec(w3p.shape, lambda i: (0, 0, 0)),
    ]
    args = (xp, w1p, b1p, wdp, bdp, w3p)
    return args, in_specs, B, b_pad, tb_eff, tbp


# ---------------------------------------------------------------------------
# entry points
# ---------------------------------------------------------------------------
def mlp_pure_rows_pallas(x, params, tb=2048, compute_dtype=jnp.float32):
    """Per-sample outputs (B, 1) before the batch sum (testing path)."""
    args, in_specs, B, b_pad, tb_eff, tbp = _prepare(x, params, tb, compute_dtype)
    num_tiles = b_pad // tb_eff
    slab = pl.pallas_call(
        _make_rows_kernel(compute_dtype),
        out_shape=jax.ShapeDtypeStruct((b_pad // PACK, PW), jnp.float32),
        grid=(num_tiles,),
        in_specs=in_specs,
        out_specs=pl.BlockSpec((tbp, PW), lambda i: (i, 0)),
        compiler_params=pltpu.CompilerParams(dimension_semantics=("parallel",)),
    )(*args)
    # unpack lanes: group-reduce the 32 lanes of each folded row (XLA-side)
    y = slab.reshape(b_pad // PACK, PACK, WIDTH).sum(axis=-1).reshape(b_pad, 1)
    b3 = params["b3"].astype(jnp.float32).reshape(1, 1)
    return y[:B] + b3


def mlp_pure_pallas(x, params, tb=2048, compute_dtype=jnp.float32):
    """Full module forward: torch.sum(out, dim=0) -> shape (1,).  Batch sum is
    fused into the kernel (one lane-dense partial per grid step)."""
    args, in_specs, B, b_pad, tb_eff, tbp = _prepare(x, params, tb, compute_dtype)
    num_tiles = b_pad // tb_eff
    partials = pl.pallas_call(
        _make_fused_kernel(B, tb_eff, compute_dtype),
        out_shape=jax.ShapeDtypeStruct((num_tiles, 1, PW), jnp.float32),
        grid=(num_tiles,),
        in_specs=in_specs,
        out_specs=pl.BlockSpec((1, 1, PW), lambda i: (i, 0, 0)),
        compiler_params=pltpu.CompilerParams(dimension_semantics=("parallel",)),
    )(*args)
    return jnp.sum(partials) + B * params["b3"].astype(jnp.float32)   # (1,)


# ---------------------------------------------------------------------------
# deterministic parameter init (shapes match the torch module's __init__)
# ---------------------------------------------------------------------------
def init_params(key):
    def linear_init(k, fan_in, fan_out):
        k1, k2 = jax.random.split(k)
        bound = 1.0 / np.sqrt(fan_in)
        w = jax.random.uniform(k1, (fan_out, fan_in), jnp.float32, -bound, bound)
        b = jax.random.uniform(k2, (fan_out,), jnp.float32, -bound, bound)
        return w, b

    ks = jax.random.split(key, NUM_LAYERS + 2)
    params = {}
    params["w1"], params["b1"] = linear_init(ks[0], INPUT_DIM, WIDTH)
    dense_w, dense_b = [], []
    for i in range(NUM_LAYERS):
        w, b = linear_init(ks[1 + i], WIDTH * (i + 1), WIDTH)
        dense_w.append(w)
        dense_b.append(b)
    params["dense_w"] = dense_w
    params["dense_b"] = dense_b
    params["w3"], params["b3"] = linear_init(ks[-1], WIDTH * (NUM_LAYERS + 1), 1)
    return params


# ---------------------------------------------------------------------------
# pure-JAX reference (mirrors the torch forward literally, incl. the concats)
# ---------------------------------------------------------------------------
def mlp_pure_ref_rows(x, params):
    x = x.astype(jnp.float32)
    out = _softplus(x @ params["w1"].T + params["b1"])
    X = out
    for i in range(NUM_LAYERS):
        Y = _softplus(X @ params["dense_w"][i].T + params["dense_b"][i])
        X = jnp.concatenate([X, Y], axis=-1)
    return X @ params["w3"].T + params["b3"]            # (B, 1)


def mlp_pure_ref(x, params):
    return jnp.sum(mlp_pure_ref_rows(x, params), axis=0)  # (1,)


if __name__ == "__main__":
    key = jax.random.PRNGKey(0)
    k_param, k_x = jax.random.split(key)

    params = init_params(k_param)
    B = 200                                   # not a multiple of the tile: exercises masking
    x = jax.random.normal(k_x, (B, INPUT_DIM), jnp.float32)

    # small tb for the test -> 2 grid steps (Bpad=256, tb=128)
    rows = jax.block_until_ready(mlp_pure_rows_pallas(x, params, tb=128))
    out = jax.block_until_ready(mlp_pure_pallas(x, params, tb=128))

    rows_ref = jax.block_until_ready(mlp_pure_ref_rows(x, params))
    ref = jax.block_until_ready(mlp_pure_ref(x, params))

    assert out.shape == (1,), out.shape
    np.testing.assert_allclose(np.asarray(rows), np.asarray(rows_ref),
                               rtol=1e-4, atol=1e-4)
    np.testing.assert_allclose(np.asarray(out), np.asarray(ref),
                               rtol=1e-3, atol=1e-2)

    # bf16 fast path (v6e/v7x EUP/VPU/MXU are bf16-capable) — smoke test only,
    # numerics intentionally differ from the f32 torch reference.
    out_bf16 = jax.block_until_ready(
        mlp_pure_pallas(x, params, tb=128, compute_dtype=jnp.bfloat16))
    assert out_bf16.shape == (1,) and bool(jnp.all(jnp.isfinite(out_bf16)))

    print("KERNEL_OK")
</pallas_src>

<mosaic_0001>
module attributes {stable_mosaic.version = 11 : i64} {
  func.func @kernel(%arg0: i32, %arg1: memref<32x24xf32, #tpu.memory_space<vmem>>, %arg2: memref<24x128xf32, #tpu.memory_space<vmem>>, %arg3: memref<1x128xf32, #tpu.memory_space<vmem>>, %arg4: memref<10x128x128xf32, #tpu.memory_space<vmem>>, %arg5: memref<4x1x128xf32, #tpu.memory_space<vmem>>, %arg6: memref<5x1x128xf32, #tpu.memory_space<vmem>>, %arg7: memref<32x128xf32, #tpu.memory_space<vmem>>) attributes {dimension_semantics = [#tpu.dimension_semantics<parallel>], iteration_bounds = array<i64: 2>, scalar_prefetch = 0 : i64, scratch_operands = 0 : i64, tpu.core_type = #tpu.core_type<tc>, window_params = [{transform_indices = @transform_0, window_bounds = array<i64: 32, 24>}, {pipeline_mode = #tpu.pipeline_mode<synchronous>, transform_indices = @transform_1, window_bounds = array<i64: 24, 128>}, {pipeline_mode = #tpu.pipeline_mode<synchronous>, transform_indices = @transform_2, window_bounds = array<i64: 1, 128>}, {pipeline_mode = #tpu.pipeline_mode<synchronous>, transform_indices = @transform_3, window_bounds = array<i64: 10, 128, 128>}, {pipeline_mode = #tpu.pipeline_mode<synchronous>, transform_indices = @transform_4, window_bounds = array<i64: 4, 1, 128>}, {pipeline_mode = #tpu.pipeline_mode<synchronous>, transform_indices = @transform_5, window_bounds = array<i64: 5, 1, 128>}, {transform_indices = @transform_6, window_bounds = array<i64: 32, 128>}]} {
    %c0 = arith.constant 0 : index
    %c0_0 = arith.constant 0 : index
    %0 = vector.load %arg1[%c0, %c0_0] : memref<32x24xf32, #tpu.memory_space<vmem>>, vector<32x24xf32>
    %c0_1 = arith.constant 0 : index
    %c0_2 = arith.constant 0 : index
    %1 = vector.load %arg2[%c0_1, %c0_2] : memref<24x128xf32, #tpu.memory_space<vmem>>, vector<24x128xf32>
    %cst = arith.constant dense<0.000000e+00> : vector<32x128xf32>
    %2 = tpu.matmul %0, %1, %cst {dimension_numbers = #tpu.dot_dimension_numbers<[1], [0], [0], [1], [0, 0, 1, 1], [], []>} : vector<32x24xf32>, vector<24x128xf32>, vector<32x128xf32> -> vector<32x128xf32>
    %c0_3 = arith.constant 0 : index
    %c0_4 = arith.constant 0 : index
    %3 = vector.load %arg3[%c0_3, %c0_4] : memref<1x128xf32, #tpu.memory_space<vmem>>, vector<1x128xf32>
    %4 = vector.broadcast %3 : vector<1x128xf32> to vector<32x128xf32>
    %5 = arith.addf %2, %4 : vector<32x128xf32>
    %cst_5 = arith.constant 2.000000e+01 : f32
    %6 = vector.broadcast %cst_5 : f32 to vector<32x128xf32>
    %7 = arith.cmpf ogt, %5, %6 : vector<32x128xf32>
    %cst_6 = arith.constant 2.000000e+01 : f32
    %8 = vector.broadcast %cst_6 : f32 to vector<32x128xf32>
    %9 = arith.minimumf %5, %8 : vector<32x128xf32>
    %10 = math.exp %9 : vector<32x128xf32>
    %11 = math.log1p %10 : vector<32x128xf32>
    %12 = arith.select %7, %5, %11 : vector<32x128xi1>, vector<32x128xf32>
    %c0_7 = arith.constant 0 : index
    %c0_8 = arith.constant 0 : index
    %c0_9 = arith.constant 0 : index
    %13 = vector.load %arg5[%c0_7, %c0_8, %c0_9] : memref<4x1x128xf32, #tpu.memory_space<vmem>>, vector<1x1x128xf32>
    %14 = vector.shape_cast %13 : vector<1x1x128xf32> to vector<1x128xf32>
    %c0_10 = arith.constant 0 : index
    %c0_11 = arith.constant 0 : index
    %c0_12 = arith.constant 0 : index
    %15 = vector.load %arg4[%c0_10, %c0_11, %c0_12] : memref<10x128x128xf32, #tpu.memory_space<vmem>>, vector<1x128x128xf32>
    %16 = vector.shape_cast %15 : vector<1x128x128xf32> to vector<128x128xf32>
    %cst_13 = arith.constant dense<0.000000e+00> : vector<32x128xf32>
    %17 = tpu.matmul %12, %16, %cst_13 {dimension_numbers = #tpu.dot_dimension_numbers<[1], [0], [0], [1], [0, 0, 1, 1], [], []>} : vector<32x128xf32>, vector<128x128xf32>, vector<32x128xf32> -> vector<32x128xf32>
    %18 = vector.broadcast %14 : vector<1x128xf32> to vector<32x128xf32>
    %19 = arith.addf %18, %17 : vector<32x128xf32>
    %cst_14 = arith.constant 2.000000e+01 : f32
    %20 = vector.broadcast %cst_14 : f32 to vector<32x128xf32>
    %21 = arith.cmpf ogt, %19, %20 : vector<32x128xf32>
    %cst_15 = arith.constant 2.000000e+01 : f32
    %22 = vector.broadcast %cst_15 : f32 to vector<32x128xf32>
    %23 = arith.minimumf %19, %22 : vector<32x128xf32>
    %24 = math.exp %23 : vector<32x128xf32>
    %25 = math.log1p %24 : vector<32x128xf32>
    %26 = arith.select %21, %19, %25 : vector<32x128xi1>, vector<32x128xf32>
    %c1 = arith.constant 1 : index
    %c0_16 = arith.constant 0 : index
    %c0_17 = arith.constant 0 : index
    %27 = vector.load %arg5[%c1, %c0_16, %c0_17] : memref<4x1x128xf32, #tpu.memory_space<vmem>>, vector<1x1x128xf32>
    %28 = vector.shape_cast %27 : vector<1x1x128xf32> to vector<1x128xf32>
    %c1_18 = arith.constant 1 : index
    %c0_19 = arith.constant 0 : index
    %c0_20 = arith.constant 0 : index
    %29 = vector.load %arg4[%c1_18, %c0_19, %c0_20] : memref<10x128x128xf32, #tpu.memory_space<vmem>>, vector<1x128x128xf32>
    %30 = vector.shape_cast %29 : vector<1x128x128xf32> to vector<128x128xf32>
    %cst_21 = arith.constant dense<0.000000e+00> : vector<32x128xf32>
    %31 = tpu.matmul %12, %30, %cst_21 {dimension_numbers = #tpu.dot_dimension_numbers<[1], [0], [0], [1], [0, 0, 1, 1], [], []>} : vector<32x128xf32>, vector<128x128xf32>, vector<32x128xf32> -> vector<32x128xf32>
    %32 = vector.broadcast %28 : vector<1x128xf32> to vector<32x128xf32>
    %33 = arith.addf %32, %31 : vector<32x128xf32>
    %c2 = arith.constant 2 : index
    %c0_22 = arith.constant 0 : index
    %c0_23 = arith.constant 0 : index
    %34 = vector.load %arg4[%c2, %c0_22, %c0_23] : memref<10x128x128xf32, #tpu.memory_space<vmem>>, vector<1x128x128xf32>
    %35 = vector.shape_cast %34 : vector<1x128x128xf32> to vector<128x128xf32>
    %cst_24 = arith.constant dense<0.000000e+00> : vector<32x128xf32>
    %36 = tpu.matmul %26, %35, %cst_24 {dimension_numbers = #tpu.dot_dimension_numbers<[1], [0], [0], [1], [0, 0, 1, 1], [], []>} : vector<32x128xf32>, vector<128x128xf32>, vector<32x128xf32> -> vector<32x128xf32>
    %37 = arith.addf %33, %36 : vector<32x128xf32>
    %cst_25 = arith.constant 2.000000e+01 : f32
    %38 = vector.broadcast %cst_25 : f32 to vector<32x128xf32>
    %39 = arith.cmpf ogt, %37, %38 : vector<32x128xf32>
    %cst_26 = arith.constant 2.000000e+01 : f32
    %40 = vector.broadcast %cst_26 : f32 to vector<32x128xf32>
    %41 = arith.minimumf %37, %40 : vector<32x128xf32>
    %42 = math.exp %41 : vector<32x128xf32>
    %43 = math.log1p %42 : vector<32x128xf32>
    %44 = arith.select %39, %37, %43 : vector<32x128xi1>, vector<32x128xf32>
    %c2_27 = arith.constant 2 : index
    %c0_28 = arith.constant 0 : index
    %c0_29 = arith.constant 0 : index
    %45 = vector.load %arg5[%c2_27, %c0_28, %c0_29] : memref<4x1x128xf32, #tpu.memory_space<vmem>>, vector<1x1x128xf32>
    %46 = vector.shape_cast %45 : vector<1x1x128xf32> to vector<1x128xf32>
    %c3 = arith.constant 3 : index
    %c0_30 = arith.constant 0 : index
    %c0_31 = arith.constant 0 : index
    %47 = vector.load %arg4[%c3, %c0_30, %c0_31] : memref<10x128x128xf32, #tpu.memory_space<vmem>>, vector<1x128x128xf32>
    %48 = vector.shape_cast %47 : vector<1x128x128xf32> to vector<128x128xf32>
    %cst_32 = arith.constant dense<0.000000e+00> : vector<32x128xf32>
    %49 = tpu.matmul %12, %48, %cst_32 {dimension_numbers = #tpu.dot_dimension_numbers<[1], [0], [0], [1], [0, 0, 1, 1], [], []>} : vector<32x128xf32>, vector<128x128xf32>, vector<32x128xf32> -> vector<32x128xf32>
    %50 = vector.broadcast %46 : vector<1x128xf32> to vector<32x128xf32>
    %51 = arith.addf %50, %49 : vector<32x128xf32>
    %c4 = arith.constant 4 : index
    %c0_33 = arith.constant 0 : index
    %c0_34 = arith.constant 0 : index
    %52 = vector.load %arg4[%c4, %c0_33, %c0_34] : memref<10x128x128xf32, #tpu.memory_space<vmem>>, vector<1x128x128xf32>
    %53 = vector.shape_cast %52 : vector<1x128x128xf32> to vector<128x128xf32>
    %cst_35 = arith.constant dense<0.000000e+00> : vector<32x128xf32>
    %54 = tpu.matmul %26, %53, %cst_35 {dimension_numbers = #tpu.dot_dimension_numbers<[1], [0], [0], [1], [0, 0, 1, 1], [], []>} : vector<32x128xf32>, vector<128x128xf32>, vector<32x128xf32> -> vector<32x128xf32>
    %55 = arith.addf %51, %54 : vector<32x128xf32>
    %c5 = arith.constant 5 : index
    %c0_36 = arith.constant 0 : index
    %c0_37 = arith.constant 0 : index
    %56 = vector.load %arg4[%c5, %c0_36, %c0_37] : memref<10x128x128xf32, #tpu.memory_space<vmem>>, vector<1x128x128xf32>
    %57 = vector.shape_cast %56 : vector<1x128x128xf32> to vector<128x128xf32>
    %cst_38 = arith.constant dense<0.000000e+00> : vector<32x128xf32>
    %58 = tpu.matmul %44, %57, %cst_38 {dimension_numbers = #tpu.dot_dimension_numbers<[1], [0], [0], [1], [0, 0, 1, 1], [], []>} : vector<32x128xf32>, vector<128x128xf32>, vector<32x128xf32> -> vector<32x128xf32>
    %59 = arith.addf %55, %58 : vector<32x128xf32>
    %cst_39 = arith.constant 2.000000e+01 : f32
    %60 = vector.broadcast %cst_39 : f32 to vector<32x128xf32>
    %61 = arith.cmpf ogt, %59, %60 : vector<32x128xf32>
    %cst_40 = arith.constant 2.000000e+01 : f32
    %62 = vector.broadcast %cst_40 : f32 to vector<32x128xf32>
    %63 = arith.minimumf %59, %62 : vector<32x128xf32>
    %64 = math.exp %63 : vector<32x128xf32>
    %65 = math.log1p %64 : vector<32x128xf32>
    %66 = arith.select %61, %59, %65 : vector<32x128xi1>, vector<32x128xf32>
    %c3_41 = arith.constant 3 : index
    %c0_42 = arith.constant 0 : index
    %c0_43 = arith.constant 0 : index
    %67 = vector.load %arg5[%c3_41, %c0_42, %c0_43] : memref<4x1x128xf32, #tpu.memory_space<vmem>>, vector<1x1x128xf32>
    %68 = vector.shape_cast %67 : vector<1x1x128xf32> to vector<1x128xf32>
    %c6 = arith.constant 6 : index
    %c0_44 = arith.constant 0 : index
    %c0_45 = arith.constant 0 : index
    %69 = vector.load %arg4[%c6, %c0_44, %c0_45] : memref<10x128x128xf32, #tpu.memory_space<vmem>>, vector<1x128x128xf32>
    %70 = vector.shape_cast %69 : vector<1x128x128xf32> to vector<128x128xf32>
    %cst_46 = arith.constant dense<0.000000e+00> : vector<32x128xf32>
    %71 = tpu.matmul %12, %70, %cst_46 {dimension_numbers = #tpu.dot_dimension_numbers<[1], [0], [0], [1], [0, 0, 1, 1], [], []>} : vector<32x128xf32>, vector<128x128xf32>, vector<32x128xf32> -> vector<32x128xf32>
    %72 = vector.broadcast %68 : vector<1x128xf32> to vector<32x128xf32>
    %73 = arith.addf %72, %71 : vector<32x128xf32>
    %c7 = arith.constant 7 : index
    %c0_47 = arith.constant 0 : index
    %c0_48 = arith.constant 0 : index
    %74 = vector.load %arg4[%c7, %c0_47, %c0_48] : memref<10x128x128xf32, #tpu.memory_space<vmem>>, vector<1x128x128xf32>
    %75 = vector.shape_cast %74 : vector<1x128x128xf32> to vector<128x128xf32>
    %cst_49 = arith.constant dense<0.000000e+00> : vector<32x128xf32>
    %76 = tpu.matmul %26, %75, %cst_49 {dimension_numbers = #tpu.dot_dimension_numbers<[1], [0], [0], [1], [0, 0, 1, 1], [], []>} : vector<32x128xf32>, vector<128x128xf32>, vector<32x128xf32> -> vector<32x128xf32>
    %77 = arith.addf %73, %76 : vector<32x128xf32>
    %c8 = arith.constant 8 : index
    %c0_50 = arith.constant 0 : index
    %c0_51 = arith.constant 0 : index
    %78 = vector.load %arg4[%c8, %c0_50, %c0_51] : memref<10x128x128xf32, #tpu.memory_space<vmem>>, vector<1x128x128xf32>
    %79 = vector.shape_cast %78 : vector<1x128x128xf32> to vector<128x128xf32>
    %cst_52 = arith.constant dense<0.000000e+00> : vector<32x128xf32>
    %80 = tpu.matmul %44, %79, %cst_52 {dimension_numbers = #tpu.dot_dimension_numbers<[1], [0], [0], [1], [0, 0, 1, 1], [], []>} : vector<32x128xf32>, vector<128x128xf32>, vector<32x128xf32> -> vector<32x128xf32>
    %81 = arith.addf %77, %80 : vector<32x128xf32>
    %c9 = arith.constant 9 : index
    %c0_53 = arith.constant 0 : index
    %c0_54 = arith.constant 0 : index
    %82 = vector.load %arg4[%c9, %c0_53, %c0_54] : memref<10x128x128xf32, #tpu.memory_space<vmem>>, vector<1x128x128xf32>
    %83 = vector.shape_cast %82 : vector<1x128x128xf32> to vector<128x128xf32>
    %cst_55 = arith.constant dense<0.000000e+00> : vector<32x128xf32>
    %84 = tpu.matmul %66, %83, %cst_55 {dimension_numbers = #tpu.dot_dimension_numbers<[1], [0], [0], [1], [0, 0, 1, 1], [], []>} : vector<32x128xf32>, vector<128x128xf32>, vector<32x128xf32> -> vector<32x128xf32>
    %85 = arith.addf %81, %84 : vector<32x128xf32>
    %cst_56 = arith.constant 2.000000e+01 : f32
    %86 = vector.broadcast %cst_56 : f32 to vector<32x128xf32>
    %87 = arith.cmpf ogt, %85, %86 : vector<32x128xf32>
    %cst_57 = arith.constant 2.000000e+01 : f32
    %88 = vector.broadcast %cst_57 : f32 to vector<32x128xf32>
    %89 = arith.minimumf %85, %88 : vector<32x128xf32>
    %90 = math.exp %89 : vector<32x128xf32>
    %91 = math.log1p %90 : vector<32x128xf32>
    %92 = arith.select %87, %85, %91 : vector<32x128xi1>, vector<32x128xf32>
    %c0_58 = arith.constant 0 : index
    %c0_59 = arith.constant 0 : index
    %c0_60 = arith.constant 0 : index
    %93 = vector.load %arg6[%c0_58, %c0_59, %c0_60] : memref<5x1x128xf32, #tpu.memory_space<vmem>>, vector<1x1x128xf32>
    %94 = vector.shape_cast %93 : vector<1x1x128xf32> to vector<1x128xf32>
    %95 = vector.broadcast %94 : vector<1x128xf32> to vector<32x128xf32>
    %96 = arith.mulf %12, %95 : vector<32x128xf32>
    %c1_61 = arith.constant 1 : index
    %c0_62 = arith.constant 0 : index
    %c0_63 = arith.constant 0 : index
    %97 = vector.load %arg6[%c1_61, %c0_62, %c0_63] : memref<5x1x128xf32, #tpu.memory_space<vmem>>, vector<1x1x128xf32>
    %98 = vector.shape_cast %97 : vector<1x1x128xf32> to vector<1x128xf32>
    %99 = vector.broadcast %98 : vector<1x128xf32> to vector<32x128xf32>
    %100 = arith.mulf %26, %99 : vector<32x128xf32>
    %101 = arith.addf %96, %100 : vector<32x128xf32>
    %c2_64 = arith.constant 2 : index
    %c0_65 = arith.constant 0 : index
    %c0_66 = arith.constant 0 : index
    %102 = vector.load %arg6[%c2_64, %c0_65, %c0_66] : memref<5x1x128xf32, #tpu.memory_space<vmem>>, vector<1x1x128xf32>
    %103 = vector.shape_cast %102 : vector<1x1x128xf32> to vector<1x128xf32>
    %104 = vector.broadcast %103 : vector<1x128xf32> to vector<32x128xf32>
    %105 = arith.mulf %44, %104 : vector<32x128xf32>
    %106 = arith.addf %101, %105 : vector<32x128xf32>
    %c3_67 = arith.constant 3 : index
    %c0_68 = arith.constant 0 : index
    %c0_69 = arith.constant 0 : index
    %107 = vector.load %arg6[%c3_67, %c0_68, %c0_69] : memref<5x1x128xf32, #tpu.memory_space<vmem>>, vector<1x1x128xf32>
    %108 = vector.shape_cast %107 : vector<1x1x128xf32> to vector<1x128xf32>
    %109 = vector.broadcast %108 : vector<1x128xf32> to vector<32x128xf32>
    %110 = arith.mulf %66, %109 : vector<32x128xf32>
    %111 = arith.addf %106, %110 : vector<32x128xf32>
    %c4_70 = arith.constant 4 : index
    %c0_71 = arith.constant 0 : index
    %c0_72 = arith.constant 0 : index
    %112 = vector.load %arg6[%c4_70, %c0_71, %c0_72] : memref<5x1x128xf32, #tpu.memory_space<vmem>>, vector<1x1x128xf32>
    %113 = vector.shape_cast %112 : vector<1x1x128xf32> to vector<1x128xf32>
    %114 = vector.broadcast %113 : vector<1x128xf32> to vector<32x128xf32>
    %115 = arith.mulf %92, %114 : vector<32x128xf32>
    %116 = arith.addf %111, %115 : vector<32x128xf32>
    %c0_73 = arith.constant 0 : index
    %c0_74 = arith.constant 0 : index
    %117 = vector.load %arg7[%c0_73, %c0_74] : memref<32x128xf32, #tpu.memory_space<vmem>>, vector<32x128xf32>
    tpu.vector_store %arg7[%c0_73, %c0_74], %116 {strides = array<i32>} : memref<32x128xf32, #tpu.memory_space<vmem>>, vector<32x128xf32>,
    return
  }
  func.func @transform_0(%arg0: i32) -> (i32, i32) {
    %c0_i32 = arith.constant 0 : i32
    %c0_i32_0 = arith.constant 0 : i32
    return %arg0, %c0_i32 : i32, i32
  }
  func.func @transform_1(%arg0: i32) -> (i32, i32) {
    %c0_i32 = arith.constant 0 : i32
    %c0_i32_0 = arith.constant 0 : i32
    %c0_i32_1 = arith.constant 0 : i32
    return %c0_i32, %c0_i32_0 : i32, i32
  }
  func.func @transform_2(%arg0: i32) -> (i32, i32) {
    %c0_i32 = arith.constant 0 : i32
    %c0_i32_0 = arith.constant 0 : i32
    %c0_i32_1 = arith.constant 0 : i32
    return %c0_i32, %c0_i32_0 : i32, i32
  }
  func.func @transform_3(%arg0: i32) -> (i32, i32, i32) {
    %c0_i32 = arith.constant 0 : i32
    %c0_i32_0 = arith.constant 0 : i32
    %c0_i32_1 = arith.constant 0 : i32
    %c0_i32_2 = arith.constant 0 : i32
    return %c0_i32, %c0_i32_0, %c0_i32_1 : i32, i32, i32
  }
  func.func @transform_4(%arg0: i32) -> (i32, i32, i32) {
    %c0_i32 = arith.constant 0 : i32
    %c0_i32_0 = arith.constant 0 : i32
    %c0_i32_1 = arith.constant 0 : i32
    %c0_i32_2 = arith.constant 0 : i32
    return %c0_i32, %c0_i32_0, %c0_i32_1 : i32, i32, i32
  }
  func.func @transform_5(%arg0: i32) -> (i32, i32, i32) {
    %c0_i32 = arith.constant 0 : i32
    %c0_i32_0 = arith.constant 0 : i32
    %c0_i32_1 = arith.constant 0 : i32
    %c0_i32_2 = arith.constant 0 : i32
    return %c0_i32, %c0_i32_0, %c0_i32_1 : i32, i32, i32
  }
  func.func @transform_6(%arg0: i32) -> (i32, i32) {
    %c0_i32 = arith.constant 0 : i32
    %c0_i32_0 = arith.constant 0 : i32
    return %arg0, %c0_i32 : i32, i32
  }
}

</mosaic_0001>

<llo_original>
// kernel: tpu_custom_call.1
$region0: #{tpu_custom_call.1}
  #allocation0 [shape = 'u32[]', space=smem, size = 0x4, offset = 0x4, fixed_abs, tag = 'smem constant byte address 0x4 - core index']
  #allocation1 [shape = 'u32[144,128]{1,0:T(1,128)}', space=vmem, size = 0x12000, scoped, tag = 'internal scratch']
  %s0 = inlined_call_operand.vmem [shape: f32[64,24], index: 0, kind: input, shape index: {}]
  %s1 = inlined_call_operand.vmem [shape: f32[24,128], index: 1, kind: input, shape index: {}]
  %s2 = inlined_call_operand.vmem [shape: f32[1,128], index: 2, kind: input, shape index: {}]
  %s3 = inlined_call_operand.hbm [shape: f32[10,128,128], index: 3, kind: input, shape index: {}]
  %s4 = inlined_call_operand.vmem [shape: f32[4,1,128], index: 4, kind: input, shape index: {}]
  %s5 = inlined_call_operand.vmem [shape: f32[5,1,128], index: 5, kind: input, shape index: {}]
  %s6 = inlined_call_operand.hbm [shape: f32[64,128], index: 6, kind: output, shape index: {}]
  %s7 = sld [smem:[#allocation0]]
  $region61: #{tpu_custom_call.1} parent=0
    _
  %s9 = ssub.s32 1, %s7
  %s10 = scalar_select 0, %s9, %s7
  $region1: #{tpu_custom_call.1} parent=0
    #allocation2 [shape = 'u8[655360]{0}', space=vmem, size = 0xa0000, scoped, tag = 'input window, operand 3, single buffered']
    #allocation3 [shape = 's32[2]{0}', space=sflag, size = 0x8, scoped, tag = 'scoped memory for tpu_custom_call.1']
    #allocation4 [shape = 's32[2]{0}', space=sflag, size = 0x8, scoped, tag = 'scoped memory for tpu_custom_call.1']
    #allocation5 [shape = 'u8[32768]{0}', space=vmem, size = 0x8000, scoped, tag = 'output window, operand 0']
    %11 = vsyncpa [#allocation3], 0
    %12 = vsyncpa [#allocation4], 0
    %s13 = scalar_lea.sflag [#allocation4], 1
    %14 = vsyncpa %s13, 0
    loop: start=0, step=1, limit=4
    $region2: #{tpu_custom_call.1} parent=1 // loop_pre_header
      _
    $region3: #{tpu_custom_call.1} parent=1 // loop_header
      %s16 = sphi 0, %s20
      %p17 = scmp.ge.s32.totalorder %s16, 4
      %s26 = sphi 0, %s28
      %s29 = sphi 0, %s26
      %s30 = sphi 0, %s29
      %s46 = sphi 0, %s30
      %s50 = sphi 0, %s50
      %s52 = sphi 0, %s50
      %s53 = sphi 0, %s52
      %s67 = sphi 0, %s53
      %s71 = sphi 0, %s71
      %s73 = sphi 0, %s71
      %s74 = sphi 0, %s73
      %s88 = sphi 0, %s74
      %s92 = sphi 0, %s92
      %s94 = sphi 0, %s92
      %s95 = sphi 0, %s94
      %s109 = sphi 0, %s95
      %s113 = sphi 0, %s113
      %s115 = sphi 0, %s113
      %s116 = sphi 0, %s115
      %s130 = sphi 0, %s116
      %s134 = sphi 0, %s134
      %s136 = sphi 0, %s134
      %s137 = sphi 0, %s136
      %s151 = sphi 0, %s137
      %s157 = sphi 0, %s159
      %s160 = sphi 0, %s157
      %s161 = sphi 0, %s160
      %s177 = sphi 0, %s161
    $region4: #{tpu_custom_call.1} parent=1 // loop_header_branch
      %19 = sbr.rel (%p17) target = $region8
    $region5: #{tpu_custom_call.1} parent=1 // loop_body
      %s21 = ssub.s32 %s16, 1
      %s22 = ssub.s32 %s16, 2
      %s23 = sadd.s32 %s16, 1
      %s24 = ssub.s32 %s16, %s23
      %p25 = scmp.eq.s32.totalorder %s24, 0
      %s27 = sadd.s32 %s26, 1
      %s28 = scalar_select %p25, %s26, %s27
      %p31 = pneg %p25
      %p32 = scmp.eq.s32.totalorder %s16, 1
      %p33 = por %p31, %p32
      %p34 = scmp.ne.s32.totalorder %s26, %s29
      %p35 = scmp.eq.s32.totalorder %s16, 0
      %p36 = por %p34, %p35
      %p37 = scmp.ne.s32.totalorder %s26, %s29
      %p38 = scmp.eq.s32.totalorder %s21, 1
      %p39 = por %p37, %p38
      %p40 = scmp.ne.s32.totalorder %s29, %s30
      %p41 = scmp.eq.s32.totalorder %s21, 0
      %p42 = por %p40, %p41
      %p43 = scmp.ne.s32.totalorder %s29, %s30
      %p44 = scmp.eq.s32.totalorder %s22, 1
      %p45 = por %p43, %p44
      %p47 = scmp.ne.s32.totalorder %s30, %s46
      %p48 = scmp.eq.s32.totalorder %s22, 0
      %p49 = por %p47, %p48
      %s51 = sadd.s32 %s50, 1
      %p54 = scmp.eq.s32.totalorder %s16, 1
      %p55 = scmp.ne.s32.totalorder %s50, %s52
      %p56 = scmp.eq.s32.totalorder %s16, 0
      %p57 = por %p55, %p56
      %p58 = scmp.ne.s32.totalorder %s50, %s52
      %p59 = scmp.eq.s32.totalorder %s21, 1
      %p60 = por %p58, %p59
      %p61 = scmp.ne.s32.totalorder %s52, %s53
      %p62 = scmp.eq.s32.totalorder %s21, 0
      %p63 = por %p61, %p62
      %p64 = scmp.ne.s32.totalorder %s52, %s53
      %p65 = scmp.eq.s32.totalorder %s22, 1
      %p66 = por %p64, %p65
      %p68 = scmp.ne.s32.totalorder %s53, %s67
      %p69 = scmp.eq.s32.totalorder %s22, 0
      %p70 = por %p68, %p69
      %s72 = sadd.s32 %s71, 1
      %p75 = scmp.eq.s32.totalorder %s16, 1
      %p76 = scmp.ne.s32.totalorder %s71, %s73
      %p77 = scmp.eq.s32.totalorder %s16, 0
      %p78 = por %p76, %p77
      %p79 = scmp.ne.s32.totalorder %s71, %s73
      %p80 = scmp.eq.s32.totalorder %s21, 1
      %p81 = por %p79, %p80
      %p82 = scmp.ne.s32.totalorder %s73, %s74
      %p83 = scmp.eq.s32.totalorder %s21, 0
      %p84 = por %p82, %p83
      %p85 = scmp.ne.s32.totalorder %s73, %s74
      %p86 = scmp.eq.s32.totalorder %s22, 1
      %p87 = por %p85, %p86
      %p89 = scmp.ne.s32.totalorder %s74, %s88
      %p90 = scmp.eq.s32.totalorder %s22, 0
      %p91 = por %p89, %p90
      %s93 = sadd.s32 %s92, 1
      %p96 = scmp.eq.s32.totalorder %s16, 1
      %p97 = scmp.ne.s32.totalorder %s92, %s94
      %p98 = scmp.eq.s32.totalorder %s16, 0
      %p99 = por %p97, %p98
      %p100 = scmp.ne.s32.totalorder %s92, %s94
      %p101 = scmp.eq.s32.totalorder %s21, 1
      %p102 = por %p100, %p101
      %p103 = scmp.ne.s32.totalorder %s94, %s95
      %p104 = scmp.eq.s32.totalorder %s21, 0
      %p105 = por %p103, %p104
      %p106 = scmp.ne.s32.totalorder %s94, %s95
      %p107 = scmp.eq.s32.totalorder %s22, 1
      %p108 = por %p106, %p107
      %p110 = scmp.ne.s32.totalorder %s95, %s109
      %p111 = scmp.eq.s32.totalorder %s22, 0
      %p112 = por %p110, %p111
      %s114 = sadd.s32 %s113, 1
      %p117 = scmp.eq.s32.totalorder %s16, 1
      %p118 = scmp.ne.s32.totalorder %s113, %s115
      %p119 = scmp.eq.s32.totalorder %s16, 0
      %p120 = por %p118, %p119
      %p121 = scmp.ne.s32.totalorder %s113, %s115
      %p122 = scmp.eq.s32.totalorder %s21, 1
      %p123 = por %p121, %p122
      %p124 = scmp.ne.s32.totalorder %s115, %s116
      %p125 = scmp.eq.s32.totalorder %s21, 0
      %p126 = por %p124, %p125
      %p127 = scmp.ne.s32.totalorder %s115, %s116
      %p128 = scmp.eq.s32.totalorder %s22, 1
      %p129 = por %p127, %p128
      %p131 = scmp.ne.s32.totalorder %s116, %s130
      %p132 = scmp.eq.s32.totalorder %s22, 0
      %p133 = por %p131, %p132
      %s135 = sadd.s32 %s134, 1
      %p138 = scmp.eq.s32.totalorder %s16, 1
      %p139 = scmp.ne.s32.totalorder %s134, %s136
      %p140 = scmp.eq.s32.totalorder %s16, 0
      %p141 = por %p139, %p140
      %p142 = scmp.ne.s32.totalorder %s134, %s136
      %p143 = scmp.eq.s32.totalorder %s21, 1
      %p144 = por %p142, %p143
      %p145 = scmp.ne.s32.totalorder %s136, %s137
      %p146 = scmp.eq.s32.totalorder %s21, 0
      %p147 = por %p145, %p146
      %p148 = scmp.ne.s32.totalorder %s136, %s137
      %p149 = scmp.eq.s32.totalorder %s22, 1
      %p150 = por %p148, %p149
      %p152 = scmp.ne.s32.totalorder %s137, %s151
      %p153 = scmp.eq.s32.totalorder %s22, 0
      %p154 = por %p152, %p153
      %s155 = ssub.s32 %s16, %s23
      %p156 = scmp.eq.s32.totalorder %s155, 0
      %s158 = sadd.s32 %s157, 1
      %s159 = scalar_select %p156, %s157, %s158
      %p162 = pneg %p156
      %p163 = scmp.eq.s32.totalorder %s16, 1
      %p164 = por %p162, %p163
      %p165 = scmp.ne.s32.totalorder %s157, %s160
      %p166 = scmp.eq.s32.totalorder %s16, 0
      %p167 = por %p165, %p166
      %p168 = scmp.ne.s32.totalorder %s157, %s160
      %p169 = scmp.eq.s32.totalorder %s21, 1
      %p170 = por %p168, %p169
      %p171 = scmp.ne.s32.totalorder %s160, %s161
      %p172 = scmp.eq.s32.totalorder %s21, 0
      %p173 = por %p171, %p172
      %p174 = scmp.ne.s32.totalorder %s160, %s161
      %p175 = scmp.eq.s32.totalorder %s22, 1
      %p176 = por %p174, %p175
      %p178 = scmp.ne.s32.totalorder %s161, %s177
      %p179 = scmp.eq.s32.totalorder %s22, 0
      %p180 = por %p178, %p179
      %p181 = scmp.le.s32.totalorder 1, %s16
      %p182 = scmp.lt.s32.totalorder %s16, 3
      %p183 = pnand %p181, %p182
      %p184 = pneg %p183
      // Predicated region
      $region9: #{tpu_custom_call.1} parent=5 // pred_check
        _
      $region10: #{tpu_custom_call.1} parent=5 // pred_check_branch
        %186 = sbr.rel (%p183) target = $region12
      $region11: #{tpu_custom_call.1} parent=5 // pred_region
        %s187 = ssub.s32 %s16, 1
        // Predicated region
        $region13: #{tpu_custom_call.1} parent=11 // pred_check
          %p188 = pneg %p63
        $region14: #{tpu_custom_call.1} parent=11 // pred_check_branch
          %190 = sbr.rel (%p188) target = $region16
        $region15: #{tpu_custom_call.1} parent=11 // pred_region
          _
        $region16: #{tpu_custom_call.1} parent=11 // pred_fallthru
          _
        // Predicated region
        $region17: #{tpu_custom_call.1} parent=11 // pred_check
          %p191 = pneg %p84
        $region18: #{tpu_custom_call.1} parent=11 // pred_check_branch
          %193 = sbr.rel (%p191) target = $region20
        $region19: #{tpu_custom_call.1} parent=11 // pred_region
          _
        $region20: #{tpu_custom_call.1} parent=11 // pred_fallthru
          _
        // Predicated region
        $region21: #{tpu_custom_call.1} parent=11 // pred_check
          %p194 = pneg %p105
        $region22: #{tpu_custom_call.1} parent=11 // pred_check_branch
          %196 = sbr.rel (%p194) target = $region24
        $region23: #{tpu_custom_call.1} parent=11 // pred_region
          %s198 = ssub.s32 20480, 20480
          %199 = vsyncadd [#allocation3], %s198
          %s200 = sshll.u32 [#allocation2], 4
          %s201 = int_to_ptr.vmem [resolvable:$true] %s200
          %206 = dma.hbm_to_vmem [thread:$0]  %s3, 20480, %s201, [#allocation3], 128, 128, 8
        $region24: #{tpu_custom_call.1} parent=11 // pred_fallthru
          _
        // Predicated region
        $region25: #{tpu_custom_call.1} parent=11 // pred_check
          %p207 = pneg %p126
        $region26: #{tpu_custom_call.1} parent=11 // pred_check_branch
          %209 = sbr.rel (%p207) target = $region28
        $region27: #{tpu_custom_call.1} parent=11 // pred_region
          _
        $region28: #{tpu_custom_call.1} parent=11 // pred_fallthru
          _
        // Predicated region
        $region29: #{tpu_custom_call.1} parent=11 // pred_check
          %p210 = pneg %p147
        $region30: #{tpu_custom_call.1} parent=11 // pred_check_branch
          %212 = sbr.rel (%p210) target = $region32
        $region31: #{tpu_custom_call.1} parent=11 // pred_region
          _
        $region32: #{tpu_custom_call.1} parent=11 // pred_fallthru
          _
      $region12: #{tpu_custom_call.1} parent=5 // pred_fallthru
        _
      %p213 = scmp.lt.s32.totalorder %s16, 2
      // Predicated region
      $region33: #{tpu_custom_call.1} parent=5 // pred_check
        %p214 = pneg %p213
      $region34: #{tpu_custom_call.1} parent=5 // pred_check_branch
        %216 = sbr.rel (%p214) target = $region36
      $region35: #{tpu_custom_call.1} parent=5 // pred_region
        // Predicated region
        $region37: #{tpu_custom_call.1} parent=35 // pred_check
          %p217 = pneg %p36
        $region38: #{tpu_custom_call.1} parent=35 // pred_check_branch
          %219 = sbr.rel (%p217) target = $region40
        $region39: #{tpu_custom_call.1} parent=35 // pred_region
          %s220 = smul.u32 4, %s16
          %p221 = scmp.lt.s32.totalorder %s220, 7
          %s222 = scalar_select %p221, %s220, 7
          %s223 = smul.addr %s222, 8
          %s224 = scalar_lea.vmem %s0, %s223
          %s225 = smul.u32 4, %s16
        $region40: #{tpu_custom_call.1} parent=35 // pred_fallthru
          _
      $region36: #{tpu_custom_call.1} parent=5 // pred_fallthru
        _
      %p226 = scmp.le.s32.totalorder 1, %s16
      %p227 = scmp.lt.s32.totalorder %s16, 3
      %p228 = pnand %p226, %p227
      %p229 = pneg %p228
      // Predicated region
      $region41: #{tpu_custom_call.1} parent=5 // pred_check
        _
      $region42: #{tpu_custom_call.1} parent=5 // pred_check_branch
        %231 = sbr.rel (%p228) target = $region44
      $region43: #{tpu_custom_call.1} parent=5 // pred_region
        %s232 = ssub.s32 %s16, 1
        // Predicated region
        $region45: #{tpu_custom_call.1} parent=43 // pred_check
          %p233 = pneg %p105
        $region46: #{tpu_custom_call.1} parent=43 // pred_check_branch
          %235 = sbr.rel (%p233) target = $region48
        $region47: #{tpu_custom_call.1} parent=43 // pred_region
          %236 = dma.done [#allocation3], 20480
        $region48: #{tpu_custom_call.1} parent=43 // pred_fallthru
          _
        %s237 = smul.u32 4, %s21
        %p238 = scmp.lt.s32.totalorder %s237, 7
        %s239 = scalar_select %p238, %s237, 7
        %s240 = smul.addr %s239, 8
        %s241 = scalar_lea.vmem %s0, %s240
        %p242 = pneg %p42
        %p243 = pneg %p39
        %p244 = pneg %p63
        %p245 = pneg %p60
        %p246 = pneg %p84
        %p247 = pneg %p81
        %p248 = pneg %p105
        %p249 = pneg %p102
        %p250 = pneg %p126
        %p251 = pneg %p123
        %p252 = pneg %p147
        %p253 = pneg %p144
        %p254 = pneg %p173
        %p255 = pneg %p170
        %s256 = sand.u32 %s160, 1
        %s257 = scalar_lea.sflag [#allocation4], %s256
        %s258 = sand.u32 %s160, 1
        %s259 = smul.addr %s258, 32
        %s260 = scalar_lea.vmem [#allocation5], %s259
        %s261 = smul.u32 4, %s21
        %p262 = scmp.lt.s32.totalorder %s261, 7
        %s263 = scalar_select %p262, %s261, 7
        %s264 = smul.addr %s263, 8
        %s265 = scalar_lea.vmem %s0, %s264
        %s266 = smul.u32 4, %s21
        %s267 = smul.u32 4, %s21
        %v268 = vld [vmem:[%s265] sm:$0xff]
        %v269 = vld [vmem:[%s265 + $0x8] sm:$0xff]
        %v270 = vld [vmem:[%s265 + $0x10] sm:$0xff]
        %v271 = vld [vmem:[%s265 + $0x18] sm:$0xff]
        %v272 = vld [vmem:[%s1] sm:$0xff]
        %v273 = vld [vmem:[%s1 + $0x8] sm:$0xff]
        %v274 = vld [vmem:[%s1 + $0x10] sm:$0xff]
        %v275 = vld [vmem:[%s2] sm:$0x1]
        %v277 = vlaneseq
        %v278 = vshrl.u32 %v277, 7
        %v279 = vsub.s32 0, %v278
        %v280 = vrot.slane %v275, %v279
        %vm282 = vcmask 195584
        %v284 = vsel %vm282, %v268, 0
        %v287 = vsel %vm282, %v269, 0
        %v290 = vsel %vm282, %v270, 0
        %v293 = vsel %vm282, %v271, 0
        %295 = vmatprep.subr.mxu0 0.0
        %296 = vmatpush1.msra.mxu0 %v272
        %297 = vmatprep.subr.mxu0 0.0
        %298 = vmatpush1.msra.mxu0 %v273
        %299 = vmatprep.subr.mxu0 0.0
        %300 = vmatpush1.msra.mxu0 %v274
        %301 = vmatprep.subr.mxu0 0.0
        %302 = vmatpush1.msra.mxu0 0.0
        %303 = vmatprep.subr.mxu0 0.0
        %304 = vmatpush1.msra.mxu0 0.0
        %305 = vmatprep.subr.mxu0 0.0
        %306 = vmatpush1.msra.mxu0 0.0
        %307 = vmatprep.subr.mxu0 0.0
        %308 = vmatpush1.msra.mxu0 0.0
        %309 = vmatprep.subr.mxu0 0.0
        %310 = vmatpush1.msra.mxu0 0.0
        %311 = vmatprep.subr.mxu0 0.0
        %312 = vmatpush1.msra.mxu0 0.0
        %313 = vmatprep.subr.mxu0 0.0
        %314 = vmatpush1.msra.mxu0 0.0
        %315 = vmatprep.subr.mxu0 0.0
        %316 = vmatpush1.msra.mxu0 0.0
        %317 = vmatprep.subr.mxu0 0.0
        %318 = vmatpush1.msra.mxu0 0.0
        %319 = vmatprep.subr.mxu0 0.0
        %320 = vmatpush1.msra.mxu0 0.0
        %321 = vmatprep.subr.mxu0 0.0
        %322 = vmatpush1.msra.mxu0 0.0
        %323 = vmatprep.subr.mxu0 0.0
        %324 = vmatpush1.msra.mxu0 0.0
        %325 = vmatprep.subr.mxu0 0.0
        %326 = vmatpush1.msra.mxu0 0.0
        %327 = vmatprep.subr.mxu0 0.0
        %328 = vmatpush1.msra.mxu0 0.0
        %329 = vmatprep.subr.mxu0 0.0
        %330 = vmatpush1.msra.mxu0 0.0
        %331 = vmatprep.subr.mxu0 0.0
        %332 = vmatpush1.msra.mxu0 0.0
        %333 = vmatprep.subr.mxu0 0.0
        %334 = vmatpush1.msra.mxu0 0.0
        %335 = vmatprep.subr.mxu0 0.0
        %336 = vmatpush1.msra.mxu0 0.0
        %337 = vmatprep.subr.mxu0 0.0
        %338 = vmatpush1.msra.mxu0 0.0
        %339 = vmatprep.subr.mxu0 0.0
        %340 = vmatpush1.msra.mxu0 0.0
        %341 = vmatprep.subr.mxu0 0.0
        %342 = vmatpush1.msra.mxu0 0.0
        %343 = vmatprep.subr.mxu0 0.0
        %344 = vmatpush1.msra.mxu0 0.0
        %345 = vmatprep.subr.mxu0 0.0
        %346 = vmatpush1.msra.mxu0 0.0
        %347 = vmatprep.subr.mxu0 0.0
        %348 = vmatpush1.msra.mxu0 0.0
        %349 = vmatprep.subr.mxu0 0.0
        %350 = vmatpush1.msra.mxu0 0.0
        %351 = vmatprep.subr.mxu0 0.0
        %352 = vmatpush1.msra.mxu0 0.0
        %353 = vmatprep.subr.mxu0 0.0
        %354 = vmatpush1.msra.mxu0 0.0
        %355 = vmatprep.subr.mxu0 0.0
        %356 = vmatpush1.msra.mxu0 0.0
        %357 = vmatprep.subr.mxu0 0.0
        %358 = vmatpush1.msra.mxu0 0.0
        %359 = vmatprep.mubr.f32.mxu0 0.0
        %360 = vmatmul.mubr.f32.gmra.mrb[0].mxu0 %v284
        %v361 = vpop.f32.mrb[0].mxu0
        %v362 = vadd.f32 %v280, %v361
        %v363 = vpop.f32.mrb[0].mxu0
        %364 = vmatprep.mubr.f32.mxu0 0.0
        %365 = vmatmul.mubr.f32.gmra.mrb[0].mxu0 %v287
        %v366 = vpop.f32.mrb[0].mxu0
        %v367 = vadd.f32 %v280, %v366
        %v368 = vpop.f32.mrb[0].mxu0
        %369 = vmatprep.mubr.f32.mxu0 0.0
        %370 = vmatmul.mubr.f32.gmra.mrb[0].mxu0 %v290
        %v371 = vpop.f32.mrb[0].mxu0
        %v372 = vadd.f32 %v280, %v371
        %v373 = vpop.f32.mrb[0].mxu0
        %374 = vmatprep.mubr.f32.mxu0 0.0
        %375 = vmatmul.mubr.f32.gmra.mrb[0].mxu0 %v293
        %v376 = vpop.f32.mrb[0].mxu0
        %v377 = vadd.f32 %v280, %v376
        %v378 = vpop.f32.mrb[0].mxu0
        %379 = vdwg.mxu0
        %vm380 = vcmp.gt.f32.partialorder %v362, 20.0
        %vm381 = vcmp.gt.f32.partialorder %v367, 20.0
        %vm382 = vcmp.gt.f32.partialorder %v372, 20.0
        %vm383 = vcmp.gt.f32.partialorder %v377, 20.0
        %v384 = vmin.f32 %v362, 20.0
        %v385 = vmin.f32 %v367, 20.0
        %v386 = vmin.f32 %v372, 20.0
        %v387 = vmin.f32 %v377, 20.0
        %v388 = vmul.f32 %v384, 1.442695
        %v389 = vpow.pop %v388
        %v390 = vmul.f32 %v385, 1.442695
        %v391 = vpow.pop %v390
        %v392 = vmul.f32 %v386, 1.442695
        %v393 = vpow.pop %v392
        %v394 = vmul.f32 %v387, 1.442695
        %v395 = vpow.pop %v394
        %v396 = vadd.f32 %v389, 1.0
        %v397 = vlog2.pop %v396
        %v398 = vmul.f32 %v397, 0.6931472
        %v399 = vmul.f32 -0.5, %v389
        %v400 = vadd.f32 %v399, 1.0
        %v401 = vmul.f32 %v400, %v389
        %v402 = vand.u32 2147483647, %v389
        %vm403 = vcmp.lt.f32.partialorder %v402, 0.0004427343
        %v404 = vsel %vm403, %v401, %v398
        %v405 = vadd.f32 %v391, 1.0
        %v406 = vlog2.pop %v405
        %v407 = vmul.f32 %v406, 0.6931472
        %v408 = vmul.f32 -0.5, %v391
        %v409 = vadd.f32 %v408, 1.0
        %v410 = vmul.f32 %v409, %v391
        %v411 = vand.u32 2147483647, %v391
        %vm412 = vcmp.lt.f32.partialorder %v411, 0.0004427343
        %v413 = vsel %vm412, %v410, %v407
        %v414 = vadd.f32 %v393, 1.0
        %v415 = vlog2.pop %v414
        %v416 = vmul.f32 %v415, 0.6931472
        %v417 = vmul.f32 -0.5, %v393
        %v418 = vadd.f32 %v417, 1.0
        %v419 = vmul.f32 %v418, %v393
        %v420 = vand.u32 2147483647, %v393
        %vm421 = vcmp.lt.f32.partialorder %v420, 0.0004427343
        %v422 = vsel %vm421, %v419, %v416
        %v423 = vadd.f32 %v395, 1.0
        %v424 = vlog2.pop %v423
        %v425 = vmul.f32 %v424, 0.6931472
        %v426 = vmul.f32 -0.5, %v395
        %v427 = vadd.f32 %v426, 1.0
        %v428 = vmul.f32 %v427, %v395
        %v429 = vand.u32 2147483647, %v395
        %vm430 = vcmp.lt.f32.partialorder %v429, 0.0004427343
        %v431 = vsel %vm430, %v428, %v425
        %v432 = vsel %vm380, %v362, %v404
        %v433 = vsel %vm381, %v367, %v413
        %v434 = vsel %vm382, %v372, %v422
        %v435 = vsel %vm383, %v377, %v431
        %v436 = vld [vmem:[%s4] sm:$0x1]
        %v437 = vld [vmem:[#allocation2] sm:$0xff]
        %v438 = vld [vmem:[#allocation2 + $0x8] sm:$0xff]
        %v439 = vld [vmem:[#allocation2 + $0x10] sm:$0xff]
        %v440 = vld [vmem:[#allocation2 + $0x18] sm:$0xff]
        %v441 = vld [vmem:[#allocation2 + $0x20] sm:$0xff]
        %v442 = vld [vmem:[#allocation2 + $0x28] sm:$0xff]
        %v443 = vld [vmem:[#allocation2 + $0x30] sm:$0xff]
        %v444 = vld [vmem:[#allocation2 + $0x38] sm:$0xff]
        %v445 = vld [vmem:[#allocation2 + $0x40] sm:$0xff]
        %v446 = vld [vmem:[#allocation2 + $0x48] sm:$0xff]
        %v447 = vld [vmem:[#allocation2 + $0x50] sm:$0xff]
        %v448 = vld [vmem:[#allocation2 + $0x58] sm:$0xff]
        %v449 = vld [vmem:[#allocation2 + $0x60] sm:$0xff]
        %v450 = vld [vmem:[#allocation2 + $0x68] sm:$0xff]
        %v451 = vld [vmem:[#allocation2 + $0x70] sm:$0xff]
        %v452 = vld [vmem:[#allocation2 + $0x78] sm:$0xff]
        %453 = vmatprep.subr.mxu0 0.0
        %454 = vmatpush1.msra.mxu0 %v437
        %455 = vmatprep.subr.mxu0 0.0
        %456 = vmatpush1.msra.mxu0 %v438
        %457 = vmatprep.subr.mxu0 0.0
        %458 = vmatpush1.msra.mxu0 %v439
        %459 = vmatprep.subr.mxu0 0.0
        %460 = vmatpush1.msra.mxu0 %v440
        %461 = vmatprep.subr.mxu0 0.0
        %462 = vmatpush1.msra.mxu0 %v441
        %463 = vmatprep.subr.mxu0 0.0
        %464 = vmatpush1.msra.mxu0 %v442
        %465 = vmatprep.subr.mxu0 0.0
        %466 = vmatpush1.msra.mxu0 %v443
        %467 = vmatprep.subr.mxu0 0.0
        %468 = vmatpush1.msra.mxu0 %v444
        %469 = vmatprep.subr.mxu0 0.0
        %470 = vmatpush1.msra.mxu0 %v445
        %471 = vmatprep.subr.mxu0 0.0
        %472 = vmatpush1.msra.mxu0 %v446
        %473 = vmatprep.subr.mxu0 0.0
        %474 = vmatpush1.msra.mxu0 %v447
        %475 = vmatprep.subr.mxu0 0.0
        %476 = vmatpush1.msra.mxu0 %v448
        %477 = vmatprep.subr.mxu0 0.0
        %478 = vmatpush1.msra.mxu0 %v449
        %479 = vmatprep.subr.mxu0 0.0
        %480 = vmatpush1.msra.mxu0 %v450
        %481 = vmatprep.subr.mxu0 0.0
        %482 = vmatpush1.msra.mxu0 %v451
        %483 = vmatprep.subr.mxu0 0.0
        %484 = vmatpush1.msra.mxu0 %v452
        %485 = vmatprep.subr.mxu0 0.0
        %486 = vmatpush1.msra.mxu0 0.0
        %487 = vmatprep.subr.mxu0 0.0
        %488 = vmatpush1.msra.mxu0 0.0
        %489 = vmatprep.subr.mxu0 0.0
        %490 = vmatpush1.msra.mxu0 0.0
        %491 = vmatprep.subr.mxu0 0.0
        %492 = vmatpush1.msra.mxu0 0.0
        %493 = vmatprep.subr.mxu0 0.0
        %494 = vmatpush1.msra.mxu0 0.0
        %495 = vmatprep.subr.mxu0 0.0
        %496 = vmatpush1.msra.mxu0 0.0
        %497 = vmatprep.subr.mxu0 0.0
        %498 = vmatpush1.msra.mxu0 0.0
        %499 = vmatprep.subr.mxu0 0.0
        %500 = vmatpush1.msra.mxu0 0.0
        %501 = vmatprep.subr.mxu0 0.0
        %502 = vmatpush1.msra.mxu0 0.0
        %503 = vmatprep.subr.mxu0 0.0
        %504 = vmatpush1.msra.mxu0 0.0
        %505 = vmatprep.subr.mxu0 0.0
        %506 = vmatpush1.msra.mxu0 0.0
        %507 = vmatprep.subr.mxu0 0.0
        %508 = vmatpush1.msra.mxu0 0.0
        %509 = vmatprep.subr.mxu0 0.0
        %510 = vmatpush1.msra.mxu0 0.0
        %511 = vmatprep.subr.mxu0 0.0
        %512 = vmatpush1.msra.mxu0 0.0
        %513 = vmatprep.subr.mxu0 0.0
        %514 = vmatpush1.msra.mxu0 0.0
        %515 = vmatprep.subr.mxu0 0.0
        %516 = vmatpush1.msra.mxu0 0.0
        %517 = vmatprep.mubr.f32.mxu0 0.0
        %518 = vmatmul.mubr.f32.gmra.mrb[0].mxu0 %v432
        %v519 = vpop.f32.mrb[0].mxu0
        %v520 = vadd.f32 0.0, %v519
        %v521 = vpop.f32.mrb[0].mxu0
        %522 = vmatprep.mubr.f32.mxu0 0.0
        %523 = vmatmul.mubr.f32.gmra.mrb[0].mxu0 %v433
        %v524 = vpop.f32.mrb[0].mxu0
        %v525 = vadd.f32 0.0, %v524
        %v526 = vpop.f32.mrb[0].mxu0
        %527 = vmatprep.mubr.f32.mxu0 0.0
        %528 = vmatmul.mubr.f32.gmra.mrb[0].mxu0 %v434
        %v529 = vpop.f32.mrb[0].mxu0
        %v530 = vadd.f32 0.0, %v529
        %v531 = vpop.f32.mrb[0].mxu0
        %532 = vmatprep.mubr.f32.mxu0 0.0
        %533 = vmatmul.mubr.f32.gmra.mrb[0].mxu0 %v435
        %v534 = vpop.f32.mrb[0].mxu0
        %v535 = vadd.f32 0.0, %v534
        %v536 = vpop.f32.mrb[0].mxu0
        %537 = vdwg.mxu0
        %v539 = vlaneseq
        %v540 = vshrl.u32 %v539, 7
        %v541 = vsub.s32 0, %v540
        %v542 = vrot.slane %v436, %v541
        %v544 = vadd.f32 %v542, %v520
        %v545 = vadd.f32 %v542, %v525
        %v546 = vadd.f32 %v542, %v530
        %v547 = vadd.f32 %v542, %v535
        %vm548 = vcmp.gt.f32.partialorder %v544, 20.0
        %vm549 = vcmp.gt.f32.partialorder %v545, 20.0
        %vm550 = vcmp.gt.f32.partialorder %v546, 20.0
        %vm551 = vcmp.gt.f32.partialorder %v547, 20.0
        %v552 = vmin.f32 %v544, 20.0
        %v553 = vmin.f32 %v545, 20.0
        %v554 = vmin.f32 %v546, 20.0
        %v555 = vmin.f32 %v547, 20.0
        %v556 = vmul.f32 %v552, 1.442695
        %v557 = vpow.pop %v556
        %v558 = vmul.f32 %v553, 1.442695
        %v559 = vpow.pop %v558
        %v560 = vmul.f32 %v554, 1.442695
        %v561 = vpow.pop %v560
        %v562 = vmul.f32 %v555, 1.442695
        %v563 = vpow.pop %v562
        %v564 = vadd.f32 %v557, 1.0
        %v565 = vlog2.pop %v564
        %v566 = vmul.f32 %v565, 0.6931472
        %v567 = vmul.f32 -0.5, %v557
        %v568 = vadd.f32 %v567, 1.0
        %v569 = vmul.f32 %v568, %v557
        %v570 = vand.u32 2147483647, %v557
        %vm571 = vcmp.lt.f32.partialorder %v570, 0.0004427343
        %v572 = vsel %vm571, %v569, %v566
        %v573 = vadd.f32 %v559, 1.0
        %v574 = vlog2.pop %v573
        %v575 = vmul.f32 %v574, 0.6931472
        %v576 = vmul.f32 -0.5, %v559
        %v577 = vadd.f32 %v576, 1.0
        %v578 = vmul.f32 %v577, %v559
        %v579 = vand.u32 2147483647, %v559
        %vm580 = vcmp.lt.f32.partialorder %v579, 0.0004427343
        %v581 = vsel %vm580, %v578, %v575
        %v582 = vadd.f32 %v561, 1.0
        %v583 = vlog2.pop %v582
        %v584 = vmul.f32 %v583, 0.6931472
        %v585 = vmul.f32 -0.5, %v561
        %v586 = vadd.f32 %v585, 1.0
        %v587 = vmul.f32 %v586, %v561
        %v588 = vand.u32 2147483647, %v561
        %vm589 = vcmp.lt.f32.partialorder %v588, 0.0004427343
        %v590 = vsel %vm589, %v587, %v584
        %v591 = vadd.f32 %v563, 1.0
        %v592 = vlog2.pop %v591
        %v593 = vmul.f32 %v592, 0.6931472
        %v594 = vmul.f32 -0.5, %v563
        %v595 = vadd.f32 %v594, 1.0
        %v596 = vmul.f32 %v595, %v563
        %v597 = vand.u32 2147483647, %v563
        %vm598 = vcmp.lt.f32.partialorder %v597, 0.0004427343
        %v599 = vsel %vm598, %v596, %v593
        %v600 = vsel %vm548, %v544, %v572
        %v601 = vsel %vm549, %v545, %v581
        %v602 = vsel %vm550, %v546, %v590
        %v603 = vsel %vm551, %v547, %v599
        %s604 = scalar_lea.vmem %s4, 1
        %v605 = vld [vmem:[%s604] sm:$0x1]
        %s606 = scalar_lea.vmem [#allocation2], 128
        %v607 = vld [vmem:[%s606] sm:$0xff]
        %v608 = vld [vmem:[%s606 + $0x8] sm:$0xff]
        %v609 = vld [vmem:[%s606 + $0x10] sm:$0xff]
        %v610 = vld [vmem:[%s606 + $0x18] sm:$0xff]
        %v611 = vld [vmem:[%s606 + $0x20] sm:$0xff]
        %v612 = vld [vmem:[%s606 + $0x28] sm:$0xff]
        %v613 = vld [vmem:[%s606 + $0x30] sm:$0xff]
        %v614 = vld [vmem:[%s606 + $0x38] sm:$0xff]
        %v615 = vld [vmem:[%s606 + $0x40] sm:$0xff]
        %v616 = vld [vmem:[%s606 + $0x48] sm:$0xff]
        %v617 = vld [vmem:[%s606 + $0x50] sm:$0xff]
        %v618 = vld [vmem:[%s606 + $0x58] sm:$0xff]
        %v619 = vld [vmem:[%s606 + $0x60] sm:$0xff]
        %v620 = vld [vmem:[%s606 + $0x68] sm:$0xff]
        %v621 = vld [vmem:[%s606 + $0x70] sm:$0xff]
        %v622 = vld [vmem:[%s606 + $0x78] sm:$0xff]
        %623 = vmatprep.subr.mxu0 0.0
        %624 = vmatpush1.msra.mxu0 %v607
        %625 = vmatprep.subr.mxu0 0.0
        %626 = vmatpush1.msra.mxu0 %v608
        %627 = vmatprep.subr.mxu0 0.0
        %628 = vmatpush1.msra.mxu0 %v609
        %629 = vmatprep.subr.mxu0 0.0
        %630 = vmatpush1.msra.mxu0 %v610
        %631 = vmatprep.subr.mxu0 0.0
        %632 = vmatpush1.msra.mxu0 %v611
        %633 = vmatprep.subr.mxu0 0.0
        %634 = vmatpush1.msra.mxu0 %v612
        %635 = vmatprep.subr.mxu0 0.0
        %636 = vmatpush1.msra.mxu0 %v613
        %637 = vmatprep.subr.mxu0 0.0
        %638 = vmatpush1.msra.mxu0 %v614
        %639 = vmatprep.subr.mxu0 0.0
        %640 = vmatpush1.msra.mxu0 %v615
        %641 = vmatprep.subr.mxu0 0.0
        %642 = vmatpush1.msra.mxu0 %v616
        %643 = vmatprep.subr.mxu0 0.0
        %644 = vmatpush1.msra.mxu0 %v617
        %645 = vmatprep.subr.mxu0 0.0
        %646 = vmatpush1.msra.mxu0 %v618
        %647 = vmatprep.subr.mxu0 0.0
        %648 = vmatpush1.msra.mxu0 %v619
        %649 = vmatprep.subr.mxu0 0.0
        %650 = vmatpush1.msra.mxu0 %v620
        %651 = vmatprep.subr.mxu0 0.0
        %652 = vmatpush1.msra.mxu0 %v621
        %653 = vmatprep.subr.mxu0 0.0
        %654 = vmatpush1.msra.mxu0 %v622
        %655 = vmatprep.subr.mxu0 0.0
        %656 = vmatpush1.msra.mxu0 0.0
        %657 = vmatprep.subr.mxu0 0.0
        %658 = vmatpush1.msra.mxu0 0.0
        %659 = vmatprep.subr.mxu0 0.0
        %660 = vmatpush1.msra.mxu0 0.0
        %661 = vmatprep.subr.mxu0 0.0
        %662 = vmatpush1.msra.mxu0 0.0
        %663 = vmatprep.subr.mxu0 0.0
        %664 = vmatpush1.msra.mxu0 0.0
        %665 = vmatprep.subr.mxu0 0.0
        %666 = vmatpush1.msra.mxu0 0.0
        %667 = vmatprep.subr.mxu0 0.0
        %668 = vmatpush1.msra.mxu0 0.0
        %669 = vmatprep.subr.mxu0 0.0
        %670 = vmatpush1.msra.mxu0 0.0
        %671 = vmatprep.subr.mxu0 0.0
        %672 = vmatpush1.msra.mxu0 0.0
        %673 = vmatprep.subr.mxu0 0.0
        %674 = vmatpush1.msra.mxu0 0.0
        %675 = vmatprep.subr.mxu0 0.0
        %676 = vmatpush1.msra.mxu0 0.0
        %677 = vmatprep.subr.mxu0 0.0
        %678 = vmatpush1.msra.mxu0 0.0
        %679 = vmatprep.subr.mxu0 0.0
        %680 = vmatpush1.msra.mxu0 0.0
        %681 = vmatprep.subr.mxu0 0.0
        %682 = vmatpush1.msra.mxu0 0.0
        %683 = vmatprep.subr.mxu0 0.0
        %684 = vmatpush1.msra.mxu0 0.0
        %685 = vmatprep.subr.mxu0 0.0
        %686 = vmatpush1.msra.mxu0 0.0
        %687 = vmatprep.mubr.f32.mxu0 0.0
        %688 = vmatmul.mubr.f32.gmra.mrb[0].mxu0 %v432
        %v689 = vpop.f32.mrb[0].mxu0
        %v690 = vadd.f32 0.0, %v689
        %v691 = vpop.f32.mrb[0].mxu0
        %692 = vmatprep.mubr.f32.mxu0 0.0
        %693 = vmatmul.mubr.f32.gmra.mrb[0].mxu0 %v433
        %v694 = vpop.f32.mrb[0].mxu0
        %v695 = vadd.f32 0.0, %v694
        %v696 = vpop.f32.mrb[0].mxu0
        %697 = vmatprep.mubr.f32.mxu0 0.0
        %698 = vmatmul.mubr.f32.gmra.mrb[0].mxu0 %v434
        %v699 = vpop.f32.mrb[0].mxu0
        %v700 = vadd.f32 0.0, %v699
        %v701 = vpop.f32.mrb[0].mxu0
        %702 = vmatprep.mubr.f32.mxu0 0.0
        %703 = vmatmul.mubr.f32.gmra.mrb[0].mxu0 %v435
        %v704 = vpop.f32.mrb[0].mxu0
        %v705 = vadd.f32 0.0, %v704
        %v706 = vpop.f32.mrb[0].mxu0
        %707 = vdwg.mxu0
        %v709 = vlaneseq
        %v710 = vshrl.u32 %v709, 7
        %v711 = vsub.s32 0, %v710
        %v712 = vrot.slane %v605, %v711
        %v714 = vadd.f32 %v712, %v690
        %v715 = vadd.f32 %v712, %v695
        %v716 = vadd.f32 %v712, %v700
        %v717 = vadd.f32 %v712, %v705
        %s718 = scalar_lea.vmem [#allocation2], 256
        %v719 = vld [vmem:[%s718] sm:$0xff]
        %v720 = vld [vmem:[%s718 + $0x8] sm:$0xff]
        %v721 = vld [vmem:[%s718 + $0x10] sm:$0xff]
        %v722 = vld [vmem:[%s718 + $0x18] sm:$0xff]
        %v723 = vld [vmem:[%s718 + $0x20] sm:$0xff]
        %v724 = vld [vmem:[%s718 + $0x28] sm:$0xff]
        %v725 = vld [vmem:[%s718 + $0x30] sm:$0xff]
        %v726 = vld [vmem:[%s718 + $0x38] sm:$0xff]
        %v727 = vld [vmem:[%s718 + $0x40] sm:$0xff]
        %v728 = vld [vmem:[%s718 + $0x48] sm:$0xff]
        %v729 = vld [vmem:[%s718 + $0x50] sm:$0xff]
        %v730 = vld [vmem:[%s718 + $0x58] sm:$0xff]
        %v731 = vld [vmem:[%s718 + $0x60] sm:$0xff]
        %v732 = vld [vmem:[%s718 + $0x68] sm:$0xff]
        %v733 = vld [vmem:[%s718 + $0x70] sm:$0xff]
        %v734 = vld [vmem:[%s718 + $0x78] sm:$0xff]
        %735 = vmatprep.subr.mxu0 0.0
        %736 = vmatpush1.msra.mxu0 %v719
        %737 = vmatprep.subr.mxu0 0.0
        %738 = vmatpush1.msra.mxu0 %v720
        %739 = vmatprep.subr.mxu0 0.0
        %740 = vmatpush1.msra.mxu0 %v721
        %741 = vmatprep.subr.mxu0 0.0
        %742 = vmatpush1.msra.mxu0 %v722
        %743 = vmatprep.subr.mxu0 0.0
        %744 = vmatpush1.msra.mxu0 %v723
        %745 = vmatprep.subr.mxu0 0.0
        %746 = vmatpush1.msra.mxu0 %v724
        %747 = vmatprep.subr.mxu0 0.0
        %748 = vmatpush1.msra.mxu0 %v725
        %749 = vmatprep.subr.mxu0 0.0
        %750 = vmatpush1.msra.mxu0 %v726
        %751 = vmatprep.subr.mxu0 0.0
        %752 = vmatpush1.msra.mxu0 %v727
        %753 = vmatprep.subr.mxu0 0.0
        %754 = vmatpush1.msra.mxu0 %v728
        %755 = vmatprep.subr.mxu0 0.0
        %756 = vmatpush1.msra.mxu0 %v729
        %757 = vmatprep.subr.mxu0 0.0
        %758 = vmatpush1.msra.mxu0 %v730
        %759 = vmatprep.subr.mxu0 0.0
        %760 = vmatpush1.msra.mxu0 %v731
        %761 = vmatprep.subr.mxu0 0.0
        %762 = vmatpush1.msra.mxu0 %v732
        %763 = vmatprep.subr.mxu0 0.0
        %764 = vmatpush1.msra.mxu0 %v733
        %765 = vmatprep.subr.mxu0 0.0
        %766 = vmatpush1.msra.mxu0 %v734
        %767 = vmatprep.subr.mxu0 0.0
        %768 = vmatpush1.msra.mxu0 0.0
        %769 = vmatprep.subr.mxu0 0.0
        %770 = vmatpush1.msra.mxu0 0.0
        %771 = vmatprep.subr.mxu0 0.0
        %772 = vmatpush1.msra.mxu0 0.0
        %773 = vmatprep.subr.mxu0 0.0
        %774 = vmatpush1.msra.mxu0 0.0
        %775 = vmatprep.subr.mxu0 0.0
        %776 = vmatpush1.msra.mxu0 0.0
        %777 = vmatprep.subr.mxu0 0.0
        %778 = vmatpush1.msra.mxu0 0.0
        %779 = vmatprep.subr.mxu0 0.0
        %780 = vmatpush1.msra.mxu0 0.0
        %781 = vmatprep.subr.mxu0 0.0
        %782 = vmatpush1.msra.mxu0 0.0
        %783 = vmatprep.subr.mxu0 0.0
        %784 = vmatpush1.msra.mxu0 0.0
        %785 = vmatprep.subr.mxu0 0.0
        %786 = vmatpush1.msra.mxu0 0.0
        %787 = vmatprep.subr.mxu0 0.0
        %788 = vmatpush1.msra.mxu0 0.0
        %789 = vmatprep.subr.mxu0 0.0
        %790 = vmatpush1.msra.mxu0 0.0
        %791 = vmatprep.subr.mxu0 0.0
        %792 = vmatpush1.msra.mxu0 0.0
        %793 = vmatprep.subr.mxu0 0.0
        %794 = vmatpush1.msra.mxu0 0.0
        %795 = vmatprep.subr.mxu0 0.0
        %796 = vmatpush1.msra.mxu0 0.0
        %797 = vmatprep.subr.mxu0 0.0
        %798 = vmatpush1.msra.mxu0 0.0
        %799 = vmatprep.mubr.f32.mxu0 0.0
        %800 = vmatmul.mubr.f32.gmra.mrb[0].mxu0 %v600
        %v801 = vpop.f32.mrb[0].mxu0
        %v802 = vadd.f32 0.0, %v801
        %v803 = vpop.f32.mrb[0].mxu0
        %804 = vmatprep.mubr.f32.mxu0 0.0
        %805 = vmatmul.mubr.f32.gmra.mrb[0].mxu0 %v601
        %v806 = vpop.f32.mrb[0].mxu0
        %v807 = vadd.f32 0.0, %v806
        %v808 = vpop.f32.mrb[0].mxu0
        %809 = vmatprep.mubr.f32.mxu0 0.0
        %810 = vmatmul.mubr.f32.gmra.mrb[0].mxu0 %v602
        %v811 = vpop.f32.mrb[0].mxu0
        %v812 = vadd.f32 0.0, %v811
        %v813 = vpop.f32.mrb[0].mxu0
        %814 = vmatprep.mubr.f32.mxu0 0.0
        %815 = vmatmul.mubr.f32.gmra.mrb[0].mxu0 %v603
        %v816 = vpop.f32.mrb[0].mxu0
        %v817 = vadd.f32 0.0, %v816
        %v818 = vpop.f32.mrb[0].mxu0
        %819 = vdwg.mxu0
        %v820 = vadd.f32 %v714, %v802
        %v821 = vadd.f32 %v715, %v807
        %v822 = vadd.f32 %v716, %v812
        %v823 = vadd.f32 %v717, %v817
        %vm824 = vcmp.gt.f32.partialorder %v820, 20.0
        %vm825 = vcmp.gt.f32.partialorder %v821, 20.0
        %vm826 = vcmp.gt.f32.partialorder %v822, 20.0
        %vm827 = vcmp.gt.f32.partialorder %v823, 20.0
        %v828 = vmin.f32 %v820, 20.0
        %v829 = vmin.f32 %v821, 20.0
        %v830 = vmin.f32 %v822, 20.0
        %v831 = vmin.f32 %v823, 20.0
        %v832 = vmul.f32 %v828, 1.442695
        %v833 = vpow.pop %v832
        %v834 = vmul.f32 %v829, 1.442695
        %v835 = vpow.pop %v834
        %v836 = vmul.f32 %v830, 1.442695
        %v837 = vpow.pop %v836
        %v838 = vmul.f32 %v831, 1.442695
        %v839 = vpow.pop %v838
        %v840 = vadd.f32 %v833, 1.0
        %v841 = vlog2.pop %v840
        %v842 = vmul.f32 %v841, 0.6931472
        %v843 = vmul.f32 -0.5, %v833
        %v844 = vadd.f32 %v843, 1.0
        %v845 = vmul.f32 %v844, %v833
        %v846 = vand.u32 2147483647, %v833
        %vm847 = vcmp.lt.f32.partialorder %v846, 0.0004427343
        %v848 = vsel %vm847, %v845, %v842
        %v849 = vadd.f32 %v835, 1.0
        %v850 = vlog2.pop %v849
        %v851 = vmul.f32 %v850, 0.6931472
        %v852 = vmul.f32 -0.5, %v835
        %v853 = vadd.f32 %v852, 1.0
        %v854 = vmul.f32 %v853, %v835
        %v855 = vand.u32 2147483647, %v835
        %vm856 = vcmp.lt.f32.partialorder %v855, 0.0004427343
        %v857 = vsel %vm856, %v854, %v851
        %v858 = vadd.f32 %v837, 1.0
        %v859 = vlog2.pop %v858
        %v860 = vmul.f32 %v859, 0.6931472
        %v861 = vmul.f32 -0.5, %v837
        %v862 = vadd.f32 %v861, 1.0
        %v863 = vmul.f32 %v862, %v837
        %v864 = vand.u32 2147483647, %v837
        %vm865 = vcmp.lt.f32.partialorder %v864, 0.0004427343
        %v866 = vsel %vm865, %v863, %v860
        %v867 = vadd.f32 %v839, 1.0
        %v868 = vlog2.pop %v867
        %v869 = vmul.f32 %v868, 0.6931472
        %v870 = vmul.f32 -0.5, %v839
        %v871 = vadd.f32 %v870, 1.0
        %v872 = vmul.f32 %v871, %v839
        %v873 = vand.u32 2147483647, %v839
        %vm874 = vcmp.lt.f32.partialorder %v873, 0.0004427343
        %v875 = vsel %vm874, %v872, %v869
        %v876 = vsel %vm824, %v820, %v848
        %v877 = vsel %vm825, %v821, %v857
        %v878 = vsel %vm826, %v822, %v866
        %v879 = vsel %vm827, %v823, %v875
        %s880 = scalar_lea.vmem %s4, 2
        %v881 = vld [vmem:[%s880] sm:$0x1]
        %s882 = scalar_lea.vmem [#allocation2], 384
        %v883 = vld [vmem:[%s882] sm:$0xff]
        %v884 = vld [vmem:[%s882 + $0x8] sm:$0xff]
        %v885 = vld [vmem:[%s882 + $0x10] sm:$0xff]
        %v886 = vld [vmem:[%s882 + $0x18] sm:$0xff]
        %v887 = vld [vmem:[%s882 + $0x20] sm:$0xff]
        %v888 = vld [vmem:[%s882 + $0x28] sm:$0xff]
        %v889 = vld [vmem:[%s882 + $0x30] sm:$0xff]
        %v890 = vld [vmem:[%s882 + $0x38] sm:$0xff]
        %v891 = vld [vmem:[%s882 + $0x40] sm:$0xff]
        %v892 = vld [vmem:[%s882 + $0x48] sm:$0xff]
        %v893 = vld [vmem:[%s882 + $0x50] sm:$0xff]
        %v894 = vld [vmem:[%s882 + $0x58] sm:$0xff]
        %v895 = vld [vmem:[%s882 + $0x60] sm:$0xff]
        %v896 = vld [vmem:[%s882 + $0x68] sm:$0xff]
        %v897 = vld [vmem:[%s882 + $0x70] sm:$0xff]
        %v898 = vld [vmem:[%s882 + $0x78] sm:$0xff]
        %899 = vmatprep.subr.mxu0 0.0
        %900 = vmatpush1.msra.mxu0 %v883
        %901 = vmatprep.subr.mxu0 0.0
        %902 = vmatpush1.msra.mxu0 %v884
        %903 = vmatprep.subr.mxu0 0.0
        %904 = vmatpush1.msra.mxu0 %v885
        %905 = vmatprep.subr.mxu0 0.0
        %906 = vmatpush1.msra.mxu0 %v886
        %907 = vmatprep.subr.mxu0 0.0
        %908 = vmatpush1.msra.mxu0 %v887
        %909 = vmatprep.subr.mxu0 0.0
        %910 = vmatpush1.msra.mxu0 %v888
        %911 = vmatprep.subr.mxu0 0.0
        %912 = vmatpush1.msra.mxu0 %v889
        %913 = vmatprep.subr.mxu0 0.0
        %914 = vmatpush1.msra.mxu0 %v890
        %915 = vmatprep.subr.mxu0 0.0
        %916 = vmatpush1.msra.mxu0 %v891
        %917 = vmatprep.subr.mxu0 0.0
        %918 = vmatpush1.msra.mxu0 %v892
        %919 = vmatprep.subr.mxu0 0.0
        %920 = vmatpush1.msra.mxu0 %v893
        %921 = vmatprep.subr.mxu0 0.0
        %922 = vmatpush1.msra.mxu0 %v894
        %923 = vmatprep.subr.mxu0 0.0
        %924 = vmatpush1.msra.mxu0 %v895
        %925 = vmatprep.subr.mxu0 0.0
        %926 = vmatpush1.msra.mxu0 %v896
        %927 = vmatprep.subr.mxu0 0.0
        %928 = vmatpush1.msra.mxu0 %v897
        %929 = vmatprep.subr.mxu0 0.0
        %930 = vmatpush1.msra.mxu0 %v898
        %931 = vmatprep.subr.mxu0 0.0
        %932 = vmatpush1.msra.mxu0 0.0
        %933 = vmatprep.subr.mxu0 0.0
        %934 = vmatpush1.msra.mxu0 0.0
        %935 = vmatprep.subr.mxu0 0.0
        %936 = vmatpush1.msra.mxu0 0.0
        %937 = vmatprep.subr.mxu0 0.0
        %938 = vmatpush1.msra.mxu0 0.0
        %939 = vmatprep.subr.mxu0 0.0
        %940 = vmatpush1.msra.mxu0 0.0
        %941 = vmatprep.subr.mxu0 0.0
        %942 = vmatpush1.msra.mxu0 0.0
        %943 = vmatprep.subr.mxu0 0.0
        %944 = vmatpush1.msra.mxu0 0.0
        %945 = vmatprep.subr.mxu0 0.0
        %946 = vmatpush1.msra.mxu0 0.0
        %947 = vmatprep.subr.mxu0 0.0
        %948 = vmatpush1.msra.mxu0 0.0
        %949 = vmatprep.subr.mxu0 0.0
        %950 = vmatpush1.msra.mxu0 0.0
        %951 = vmatprep.subr.mxu0 0.0
        %952 = vmatpush1.msra.mxu0 0.0
        %953 = vmatprep.subr.mxu0 0.0
        %954 = vmatpush1.msra.mxu0 0.0
        %955 = vmatprep.subr.mxu0 0.0
        %956 = vmatpush1.msra.mxu0 0.0
        %957 = vmatprep.subr.mxu0 0.0
        %958 = vmatpush1.msra.mxu0 0.0
        %959 = vmatprep.subr.mxu0 0.0
        %960 = vmatpush1.msra.mxu0 0.0
        %961 = vmatprep.subr.mxu0 0.0
        %962 = vmatpush1.msra.mxu0 0.0
        %963 = vmatprep.mubr.f32.mxu0 0.0
        %964 = vmatmul.mubr.f32.gmra.mrb[0].mxu0 %v432
        %v965 = vpop.f32.mrb[0].mxu0
        %v966 = vadd.f32 0.0, %v965
        %v967 = vpop.f32.mrb[0].mxu0
        %968 = vmatprep.mubr.f32.mxu0 0.0
        %969 = vmatmul.mubr.f32.gmra.mrb[0].mxu0 %v433
        %v970 = vpop.f32.mrb[0].mxu0
        %v971 = vadd.f32 0.0, %v970
        %v972 = vpop.f32.mrb[0].mxu0
        %973 = vmatprep.mubr.f32.mxu0 0.0
        %974 = vmatmul.mubr.f32.gmra.mrb[0].mxu0 %v434
        %v975 = vpop.f32.mrb[0].mxu0
        %v976 = vadd.f32 0.0, %v975
        %v977 = vpop.f32.mrb[0].mxu0
        %978 = vmatprep.mubr.f32.mxu0 0.0
        %979 = vmatmul.mubr.f32.gmra.mrb[0].mxu0 %v435
        %v980 = vpop.f32.mrb[0].mxu0
        %v981 = vadd.f32 0.0, %v980
        %v982 = vpop.f32.mrb[0].mxu0
        %983 = vdwg.mxu0
        %v985 = vlaneseq
        %v986 = vshrl.u32 %v985, 7
        %v987 = vsub.s32 0, %v986
        %v988 = vrot.slane %v881, %v987
        %v990 = vadd.f32 %v988, %v966
        %v991 = vadd.f32 %v988, %v971
        %v992 = vadd.f32 %v988, %v976
        %v993 = vadd.f32 %v988, %v981
        %s994 = scalar_lea.vmem [#allocation2], 512
        %v995 = vld [vmem:[%s994] sm:$0xff]
        %v996 = vld [vmem:[%s994 + $0x8] sm:$0xff]
        %v997 = vld [vmem:[%s994 + $0x10] sm:$0xff]
        %v998 = vld [vmem:[%s994 + $0x18] sm:$0xff]
        %v999 = vld [vmem:[%s994 + $0x20] sm:$0xff]
        %v1000 = vld [vmem:[%s994 + $0x28] sm:$0xff]
        %v1001 = vld [vmem:[%s994 + $0x30] sm:$0xff]
        %v1002 = vld [vmem:[%s994 + $0x38] sm:$0xff]
        %v1003 = vld [vmem:[%s994 + $0x40] sm:$0xff]
        %v1004 = vld [vmem:[%s994 + $0x48] sm:$0xff]
        %v1005 = vld [vmem:[%s994 + $0x50] sm:$0xff]
        %v1006 = vld [vmem:[%s994 + $0x58] sm:$0xff]
        %v1007 = vld [vmem:[%s994 + $0x60] sm:$0xff]
        %v1008 = vld [vmem:[%s994 + $0x68] sm:$0xff]
        %v1009 = vld [vmem:[%s994 + $0x70] sm:$0xff]
        %v1010 = vld [vmem:[%s994 + $0x78] sm:$0xff]
        %1011 = vmatprep.subr.mxu0 0.0
        %1012 = vmatpush1.msra.mxu0 %v995
        %1013 = vmatprep.subr.mxu0 0.0
        %1014 = vmatpush1.msra.mxu0 %v996
        %1015 = vmatprep.subr.mxu0 0.0
        %1016 = vmatpush1.msra.mxu0 %v997
        %1017 = vmatprep.subr.mxu0 0.0
        %1018 = vmatpush1.msra.mxu0 %v998
        %1019 = vmatprep.subr.mxu0 0.0
        %1020 = vmatpush1.msra.mxu0 %v999
        %1021 = vmatprep.subr.mxu0 0.0
        %1022 = vmatpush1.msra.mxu0 %v1000
        %1023 = vmatprep.subr.mxu0 0.0
        %1024 = vmatpush1.msra.mxu0 %v1001
        %1025 = vmatprep.subr.mxu0 0.0
        %1026 = vmatpush1.msra.mxu0 %v1002
        %1027 = vmatprep.subr.mxu0 0.0
        %1028 = vmatpush1.msra.mxu0 %v1003
        %1029 = vmatprep.subr.mxu0 0.0
        %1030 = vmatpush1.msra.mxu0 %v1004
        %1031 = vmatprep.subr.mxu0 0.0
        %1032 = vmatpush1.msra.mxu0 %v1005
        %1033 = vmatprep.subr.mxu0 0.0
        %1034 = vmatpush1.msra.mxu0 %v1006
        %1035 = vmatprep.subr.mxu0 0.0
        %1036 = vmatpush1.msra.mxu0 %v1007
        %1037 = vmatprep.subr.mxu0 0.0
        %1038 = vmatpush1.msra.mxu0 %v1008
        %1039 = vmatprep.subr.mxu0 0.0
        %1040 = vmatpush1.msra.mxu0 %v1009
        %1041 = vmatprep.subr.mxu0 0.0
        %1042 = vmatpush1.msra.mxu0 %v1010
        %1043 = vmatprep.subr.mxu0 0.0
        %1044 = vmatpush1.msra.mxu0 0.0
        %1045 = vmatprep.subr.mxu0 0.0
        %1046 = vmatpush1.msra.mxu0 0.0
        %1047 = vmatprep.subr.mxu0 0.0
        %1048 = vmatpush1.msra.mxu0 0.0
        %1049 = vmatprep.subr.mxu0 0.0
        %1050 = vmatpush1.msra.mxu0 0.0
        %1051 = vmatprep.subr.mxu0 0.0
        %1052 = vmatpush1.msra.mxu0 0.0
        %1053 = vmatprep.subr.mxu0 0.0
        %1054 = vmatpush1.msra.mxu0 0.0
        %1055 = vmatprep.subr.mxu0 0.0
        %1056 = vmatpush1.msra.mxu0 0.0
        %1057 = vmatprep.subr.mxu0 0.0
        %1058 = vmatpush1.msra.mxu0 0.0
        %1059 = vmatprep.subr.mxu0 0.0
        %1060 = vmatpush1.msra.mxu0 0.0
        %1061 = vmatprep.subr.mxu0 0.0
        %1062 = vmatpush1.msra.mxu0 0.0
        %1063 = vmatprep.subr.mxu0 0.0
        %1064 = vmatpush1.msra.mxu0 0.0
        %1065 = vmatprep.subr.mxu0 0.0
        %1066 = vmatpush1.msra.mxu0 0.0
        %1067 = vmatprep.subr.mxu0 0.0
        %1068 = vmatpush1.msra.mxu0 0.0
        %1069 = vmatprep.subr.mxu0 0.0
        %1070 = vmatpush1.msra.mxu0 0.0
        %1071 = vmatprep.subr.mxu0 0.0
        %1072 = vmatpush1.msra.mxu0 0.0
        %1073 = vmatprep.subr.mxu0 0.0
        %1074 = vmatpush1.msra.mxu0 0.0
        %1075 = vmatprep.mubr.f32.mxu0 0.0
        %1076 = vmatmul.mubr.f32.gmra.mrb[0].mxu0 %v600
        %v1077 = vpop.f32.mrb[0].mxu0
        %v1078 = vadd.f32 0.0, %v1077
        %v1079 = vpop.f32.mrb[0].mxu0
        %1080 = vmatprep.mubr.f32.mxu0 0.0
        %1081 = vmatmul.mubr.f32.gmra.mrb[0].mxu0 %v601
        %v1082 = vpop.f32.mrb[0].mxu0
        %v1083 = vadd.f32 0.0, %v1082
        %v1084 = vpop.f32.mrb[0].mxu0
        %1085 = vmatprep.mubr.f32.mxu0 0.0
        %1086 = vmatmul.mubr.f32.gmra.mrb[0].mxu0 %v602
        %v1087 = vpop.f32.mrb[0].mxu0
        %v1088 = vadd.f32 0.0, %v1087
        %v1089 = vpop.f32.mrb[0].mxu0
        %1090 = vmatprep.mubr.f32.mxu0 0.0
        %1091 = vmatmul.mubr.f32.gmra.mrb[0].mxu0 %v603
        %v1092 = vpop.f32.mrb[0].mxu0
        %v1093 = vadd.f32 0.0, %v1092
        %v1094 = vpop.f32.mrb[0].mxu0
        %1095 = vdwg.mxu0
        %v1096 = vadd.f32 %v990, %v1078
        %v1097 = vadd.f32 %v991, %v1083
        %v1098 = vadd.f32 %v992, %v1088
        %v1099 = vadd.f32 %v993, %v1093
        %s1100 = scalar_lea.vmem [#allocation2], 640
        %v1101 = vld [vmem:[%s1100] sm:$0xff]
        %v1102 = vld [vmem:[%s1100 + $0x8] sm:$0xff]
        %v1103 = vld [vmem:[%s1100 + $0x10] sm:$0xff]
        %v1104 = vld [vmem:[%s1100 + $0x18] sm:$0xff]
        %v1105 = vld [vmem:[%s1100 + $0x20] sm:$0xff]
        %v1106 = vld [vmem:[%s1100 + $0x28] sm:$0xff]
        %v1107 = vld [vmem:[%s1100 + $0x30] sm:$0xff]
        %v1108 = vld [vmem:[%s1100 + $0x38] sm:$0xff]
        %v1109 = vld [vmem:[%s1100 + $0x40] sm:$0xff]
        %v1110 = vld [vmem:[%s1100 + $0x48] sm:$0xff]
        %v1111 = vld [vmem:[%s1100 + $0x50] sm:$0xff]
        %v1112 = vld [vmem:[%s1100 + $0x58] sm:$0xff]
        %v1113 = vld [vmem:[%s1100 + $0x60] sm:$0xff]
        %v1114 = vld [vmem:[%s1100 + $0x68] sm:$0xff]
        %v1115 = vld [vmem:[%s1100 + $0x70] sm:$0xff]
        %v1116 = vld [vmem:[%s1100 + $0x78] sm:$0xff]
        %1117 = vmatprep.subr.mxu0 0.0
        %1118 = vmatpush1.msra.mxu0 %v1101
        %1119 = vmatprep.subr.mxu0 0.0
        %1120 = vmatpush1.msra.mxu0 %v1102
        %1121 = vmatprep.subr.mxu0 0.0
        %1122 = vmatpush1.msra.mxu0 %v1103
        %1123 = vmatprep.subr.mxu0 0.0
        %1124 = vmatpush1.msra.mxu0 %v1104
        %1125 = vmatprep.subr.mxu0 0.0
        %1126 = vmatpush1.msra.mxu0 %v1105
        %1127 = vmatprep.subr.mxu0 0.0
        %1128 = vmatpush1.msra.mxu0 %v1106
        %1129 = vmatprep.subr.mxu0 0.0
        %1130 = vmatpush1.msra.mxu0 %v1107
        %1131 = vmatprep.subr.mxu0 0.0
        %1132 = vmatpush1.msra.mxu0 %v1108
        %1133 = vmatprep.subr.mxu0 0.0
        %1134 = vmatpush1.msra.mxu0 %v1109
        %1135 = vmatprep.subr.mxu0 0.0
        %1136 = vmatpush1.msra.mxu0 %v1110
        %1137 = vmatprep.subr.mxu0 0.0
        %1138 = vmatpush1.msra.mxu0 %v1111
        %1139 = vmatprep.subr.mxu0 0.0
        %1140 = vmatpush1.msra.mxu0 %v1112
        %1141 = vmatprep.subr.mxu0 0.0
        %1142 = vmatpush1.msra.mxu0 %v1113
        %1143 = vmatprep.subr.mxu0 0.0
        %1144 = vmatpush1.msra.mxu0 %v1114
        %1145 = vmatprep.subr.mxu0 0.0
        %1146 = vmatpush1.msra.mxu0 %v1115
        %1147 = vmatprep.subr.mxu0 0.0
        %1148 = vmatpush1.msra.mxu0 %v1116
        %1149 = vmatprep.subr.mxu0 0.0
        %1150 = vmatpush1.msra.mxu0 0.0
        %1151 = vmatprep.subr.mxu0 0.0
        %1152 = vmatpush1.msra.mxu0 0.0
        %1153 = vmatprep.subr.mxu0 0.0
        %1154 = vmatpush1.msra.mxu0 0.0
        %1155 = vmatprep.subr.mxu0 0.0
        %1156 = vmatpush1.msra.mxu0 0.0
        %1157 = vmatprep.subr.mxu0 0.0
        %1158 = vmatpush1.msra.mxu0 0.0
        %1159 = vmatprep.subr.mxu0 0.0
        %1160 = vmatpush1.msra.mxu0 0.0
        %1161 = vmatprep.subr.mxu0 0.0
        %1162 = vmatpush1.msra.mxu0 0.0
        %1163 = vmatprep.subr.mxu0 0.0
        %1164 = vmatpush1.msra.mxu0 0.0
        %1165 = vmatprep.subr.mxu0 0.0
        %1166 = vmatpush1.msra.mxu0 0.0
        %1167 = vmatprep.subr.mxu0 0.0
        %1168 = vmatpush1.msra.mxu0 0.0
        %1169 = vmatprep.subr.mxu0 0.0
        %1170 = vmatpush1.msra.mxu0 0.0
        %1171 = vmatprep.subr.mxu0 0.0
        %1172 = vmatpush1.msra.mxu0 0.0
        %1173 = vmatprep.subr.mxu0 0.0
        %1174 = vmatpush1.msra.mxu0 0.0
        %1175 = vmatprep.subr.mxu0 0.0
        %1176 = vmatpush1.msra.mxu0 0.0
        %1177 = vmatprep.subr.mxu0 0.0
        %1178 = vmatpush1.msra.mxu0 0.0
        %1179 = vmatprep.subr.mxu0 0.0
        %1180 = vmatpush1.msra.mxu0 0.0
        %1181 = vmatprep.mubr.f32.mxu0 0.0
        %1182 = vmatmul.mubr.f32.gmra.mrb[0].mxu0 %v876
        %v1183 = vpop.f32.mrb[0].mxu0
        %v1184 = vadd.f32 0.0, %v1183
        %v1185 = vpop.f32.mrb[0].mxu0
        %1186 = vmatprep.mubr.f32.mxu0 0.0
        %1187 = vmatmul.mubr.f32.gmra.mrb[0].mxu0 %v877
        %v1188 = vpop.f32.mrb[0].mxu0
        %v1189 = vadd.f32 0.0, %v1188
        %v1190 = vpop.f32.mrb[0].mxu0
        %1191 = vmatprep.mubr.f32.mxu0 0.0
        %1192 = vmatmul.mubr.f32.gmra.mrb[0].mxu0 %v878
        %v1193 = vpop.f32.mrb[0].mxu0
        %v1194 = vadd.f32 0.0, %v1193
        %v1195 = vpop.f32.mrb[0].mxu0
        %1196 = vmatprep.mubr.f32.mxu0 0.0
        %1197 = vmatmul.mubr.f32.gmra.mrb[0].mxu0 %v879
        %v1198 = vpop.f32.mrb[0].mxu0
        %v1199 = vadd.f32 0.0, %v1198
        %v1200 = vpop.f32.mrb[0].mxu0
        %1201 = vdwg.mxu0
        %v1202 = vadd.f32 %v1096, %v1184
        %v1203 = vadd.f32 %v1097, %v1189
        %v1204 = vadd.f32 %v1098, %v1194
        %v1205 = vadd.f32 %v1099, %v1199
        %vm1206 = vcmp.gt.f32.partialorder %v1202, 20.0
        %vm1207 = vcmp.gt.f32.partialorder %v1203, 20.0
        %vm1208 = vcmp.gt.f32.partialorder %v1204, 20.0
        %vm1209 = vcmp.gt.f32.partialorder %v1205, 20.0
        %v1210 = vmin.f32 %v1202, 20.0
        %v1211 = vmin.f32 %v1203, 20.0
        %v1212 = vmin.f32 %v1204, 20.0
        %v1213 = vmin.f32 %v1205, 20.0
        %v1214 = vmul.f32 %v1210, 1.442695
        %v1215 = vpow.pop %v1214
        %v1216 = vmul.f32 %v1211, 1.442695
        %v1217 = vpow.pop %v1216
        %v1218 = vmul.f32 %v1212, 1.442695
        %v1219 = vpow.pop %v1218
        %v1220 = vmul.f32 %v1213, 1.442695
        %v1221 = vpow.pop %v1220
        %v1222 = vadd.f32 %v1215, 1.0
        %v1223 = vlog2.pop %v1222
        %v1224 = vmul.f32 %v1223, 0.6931472
        %v1225 = vmul.f32 -0.5, %v1215
        %v1226 = vadd.f32 %v1225, 1.0
        %v1227 = vmul.f32 %v1226, %v1215
        %v1228 = vand.u32 2147483647, %v1215
        %vm1229 = vcmp.lt.f32.partialorder %v1228, 0.0004427343
        %v1230 = vsel %vm1229, %v1227, %v1224
        %v1231 = vadd.f32 %v1217, 1.0
        %v1232 = vlog2.pop %v1231
        %v1233 = vmul.f32 %v1232, 0.6931472
        %v1234 = vmul.f32 -0.5, %v1217
        %v1235 = vadd.f32 %v1234, 1.0
        %v1236 = vmul.f32 %v1235, %v1217
        %v1237 = vand.u32 2147483647, %v1217
        %vm1238 = vcmp.lt.f32.partialorder %v1237, 0.0004427343
        %v1239 = vsel %vm1238, %v1236, %v1233
        %v1240 = vadd.f32 %v1219, 1.0
        %v1241 = vlog2.pop %v1240
        %v1242 = vmul.f32 %v1241, 0.6931472
        %v1243 = vmul.f32 -0.5, %v1219
        %v1244 = vadd.f32 %v1243, 1.0
        %v1245 = vmul.f32 %v1244, %v1219
        %v1246 = vand.u32 2147483647, %v1219
        %vm1247 = vcmp.lt.f32.partialorder %v1246, 0.0004427343
        %v1248 = vsel %vm1247, %v1245, %v1242
        %v1249 = vadd.f32 %v1221, 1.0
        %v1250 = vlog2.pop %v1249
        %v1251 = vmul.f32 %v1250, 0.6931472
        %v1252 = vmul.f32 -0.5, %v1221
        %v1253 = vadd.f32 %v1252, 1.0
        %v1254 = vmul.f32 %v1253, %v1221
        %v1255 = vand.u32 2147483647, %v1221
        %vm1256 = vcmp.lt.f32.partialorder %v1255, 0.0004427343
        %v1257 = vsel %vm1256, %v1254, %v1251
        %v1258 = vsel %vm1206, %v1202, %v1230
        %v1259 = vsel %vm1207, %v1203, %v1239
        %v1260 = vsel %vm1208, %v1204, %v1248
        %v1261 = vsel %vm1209, %v1205, %v1257
        %s1262 = scalar_lea.vmem %s4, 3
        %v1263 = vld [vmem:[%s1262] sm:$0x1]
        %s1264 = scalar_lea.vmem [#allocation2], 768
        %v1265 = vld [vmem:[%s1264] sm:$0xff]
        %v1266 = vld [vmem:[%s1264 + $0x8] sm:$0xff]
        %v1267 = vld [vmem:[%s1264 + $0x10] sm:$0xff]
        %v1268 = vld [vmem:[%s1264 + $0x18] sm:$0xff]
        %v1269 = vld [vmem:[%s1264 + $0x20] sm:$0xff]
        %v1270 = vld [vmem:[%s1264 + $0x28] sm:$0xff]
        %v1271 = vld [vmem:[%s1264 + $0x30] sm:$0xff]
        %v1272 = vld [vmem:[%s1264 + $0x38] sm:$0xff]
        %v1273 = vld [vmem:[%s1264 + $0x40] sm:$0xff]
        %v1274 = vld [vmem:[%s1264 + $0x48] sm:$0xff]
        %v1275 = vld [vmem:[%s1264 + $0x50] sm:$0xff]
        %v1276 = vld [vmem:[%s1264 + $0x58] sm:$0xff]
        %v1277 = vld [vmem:[%s1264 + $0x60] sm:$0xff]
        %v1278 = vld [vmem:[%s1264 + $0x68] sm:$0xff]
        %v1279 = vld [vmem:[%s1264 + $0x70] sm:$0xff]
        %v1280 = vld [vmem:[%s1264 + $0x78] sm:$0xff]
        %1281 = vmatprep.subr.mxu0 0.0
        %1282 = vmatpush1.msra.mxu0 %v1265
        %1283 = vmatprep.subr.mxu0 0.0
        %1284 = vmatpush1.msra.mxu0 %v1266
        %1285 = vmatprep.subr.mxu0 0.0
        %1286 = vmatpush1.msra.mxu0 %v1267
        %1287 = vmatprep.subr.mxu0 0.0
        %1288 = vmatpush1.msra.mxu0 %v1268
        %1289 = vmatprep.subr.mxu0 0.0
        %1290 = vmatpush1.msra.mxu0 %v1269
        %1291 = vmatprep.subr.mxu0 0.0
        %1292 = vmatpush1.msra.mxu0 %v1270
        %1293 = vmatprep.subr.mxu0 0.0
        %1294 = vmatpush1.msra.mxu0 %v1271
        %1295 = vmatprep.subr.mxu0 0.0
        %1296 = vmatpush1.msra.mxu0 %v1272
        %1297 = vmatprep.subr.mxu0 0.0
        %1298 = vmatpush1.msra.mxu0 %v1273
        %1299 = vmatprep.subr.mxu0 0.0
        %1300 = vmatpush1.msra.mxu0 %v1274
        %1301 = vmatprep.subr.mxu0 0.0
        %1302 = vmatpush1.msra.mxu0 %v1275
        %1303 = vmatprep.subr.mxu0 0.0
        %1304 = vmatpush1.msra.mxu0 %v1276
        %1305 = vmatprep.subr.mxu0 0.0
        %1306 = vmatpush1.msra.mxu0 %v1277
        %1307 = vmatprep.subr.mxu0 0.0
        %1308 = vmatpush1.msra.mxu0 %v1278
        %1309 = vmatprep.subr.mxu0 0.0
        %1310 = vmatpush1.msra.mxu0 %v1279
        %1311 = vmatprep.subr.mxu0 0.0
        %1312 = vmatpush1.msra.mxu0 %v1280
        %1313 = vmatprep.subr.mxu0 0.0
        %1314 = vmatpush1.msra.mxu0 0.0
        %1315 = vmatprep.subr.mxu0 0.0
        %1316 = vmatpush1.msra.mxu0 0.0
        %1317 = vmatprep.subr.mxu0 0.0
        %1318 = vmatpush1.msra.mxu0 0.0
        %1319 = vmatprep.subr.mxu0 0.0
        %1320 = vmatpush1.msra.mxu0 0.0
        %1321 = vmatprep.subr.mxu0 0.0
        %1322 = vmatpush1.msra.mxu0 0.0
        %1323 = vmatprep.subr.mxu0 0.0
        %1324 = vmatpush1.msra.mxu0 0.0
        %1325 = vmatprep.subr.mxu0 0.0
        %1326 = vmatpush1.msra.mxu0 0.0
        %1327 = vmatprep.subr.mxu0 0.0
        %1328 = vmatpush1.msra.mxu0 0.0
        %1329 = vmatprep.subr.mxu0 0.0
        %1330 = vmatpush1.msra.mxu0 0.0
        %1331 = vmatprep.subr.mxu0 0.0
        %1332 = vmatpush1.msra.mxu0 0.0
        %1333 = vmatprep.subr.mxu0 0.0
        %1334 = vmatpush1.msra.mxu0 0.0
        %1335 = vmatprep.subr.mxu0 0.0
        %1336 = vmatpush1.msra.mxu0 0.0
        %1337 = vmatprep.subr.mxu0 0.0
        %1338 = vmatpush1.msra.mxu0 0.0
        %1339 = vmatprep.subr.mxu0 0.0
        %1340 = vmatpush1.msra.mxu0 0.0
        %1341 = vmatprep.subr.mxu0 0.0
        %1342 = vmatpush1.msra.mxu0 0.0
        %1343 = vmatprep.subr.mxu0 0.0
        %1344 = vmatpush1.msra.mxu0 0.0
        %1345 = vmatprep.mubr.f32.mxu0 0.0
        %1346 = vmatmul.mubr.f32.gmra.mrb[0].mxu0 %v432
        %v1347 = vpop.f32.mrb[0].mxu0
        %v1348 = vadd.f32 0.0, %v1347
        %v1349 = vpop.f32.mrb[0].mxu0
        %1350 = vmatprep.mubr.f32.mxu0 0.0
        %1351 = vmatmul.mubr.f32.gmra.mrb[0].mxu0 %v433
        %v1352 = vpop.f32.mrb[0].mxu0
        %v1353 = vadd.f32 0.0, %v1352
        %v1354 = vpop.f32.mrb[0].mxu0
        %1355 = vmatprep.mubr.f32.mxu0 0.0
        %1356 = vmatmul.mubr.f32.gmra.mrb[0].mxu0 %v434
        %v1357 = vpop.f32.mrb[0].mxu0
        %v1358 = vadd.f32 0.0, %v1357
        %v1359 = vpop.f32.mrb[0].mxu0
        %1360 = vmatprep.mubr.f32.mxu0 0.0
        %1361 = vmatmul.mubr.f32.gmra.mrb[0].mxu0 %v435
        %v1362 = vpop.f32.mrb[0].mxu0
        %v1363 = vadd.f32 0.0, %v1362
        %v1364 = vpop.f32.mrb[0].mxu0
        %1365 = vdwg.mxu0
        %v1367 = vlaneseq
        %v1368 = vshrl.u32 %v1367, 7
        %v1369 = vsub.s32 0, %v1368
        %v1370 = vrot.slane %v1263, %v1369
        %v1372 = vadd.f32 %v1370, %v1348
        %v1373 = vadd.f32 %v1370, %v1353
        %v1374 = vadd.f32 %v1370, %v1358
        %v1375 = vadd.f32 %v1370, %v1363
        %s1376 = scalar_lea.vmem [#allocation2], 896
        %v1377 = vld [vmem:[%s1376] sm:$0xff]
        %v1378 = vld [vmem:[%s1376 + $0x8] sm:$0xff]
        %v1379 = vld [vmem:[%s1376 + $0x10] sm:$0xff]
        %v1380 = vld [vmem:[%s1376 + $0x18] sm:$0xff]
        %v1381 = vld [vmem:[%s1376 + $0x20] sm:$0xff]
        %v1382 = vld [vmem:[%s1376 + $0x28] sm:$0xff]
        %v1383 = vld [vmem:[%s1376 + $0x30] sm:$0xff]
        %v1384 = vld [vmem:[%s1376 + $0x38] sm:$0xff]
        %v1385 = vld [vmem:[%s1376 + $0x40] sm:$0xff]
        %v1386 = vld [vmem:[%s1376 + $0x48] sm:$0xff]
        %v1387 = vld [vmem:[%s1376 + $0x50] sm:$0xff]
        %v1388 = vld [vmem:[%s1376 + $0x58] sm:$0xff]
        %v1389 = vld [vmem:[%s1376 + $0x60] sm:$0xff]
        %v1390 = vld [vmem:[%s1376 + $0x68] sm:$0xff]
        %v1391 = vld [vmem:[%s1376 + $0x70] sm:$0xff]
        %v1392 = vld [vmem:[%s1376 + $0x78] sm:$0xff]
        %1393 = vmatprep.subr.mxu0 0.0
        %1394 = vmatpush1.msra.mxu0 %v1377
        %1395 = vmatprep.subr.mxu0 0.0
        %1396 = vmatpush1.msra.mxu0 %v1378
        %1397 = vmatprep.subr.mxu0 0.0
        %1398 = vmatpush1.msra.mxu0 %v1379
        %1399 = vmatprep.subr.mxu0 0.0
        %1400 = vmatpush1.msra.mxu0 %v1380
        %1401 = vmatprep.subr.mxu0 0.0
        %1402 = vmatpush1.msra.mxu0 %v1381
        %1403 = vmatprep.subr.mxu0 0.0
        %1404 = vmatpush1.msra.mxu0 %v1382
        %1405 = vmatprep.subr.mxu0 0.0
        %1406 = vmatpush1.msra.mxu0 %v1383
        %1407 = vmatprep.subr.mxu0 0.0
        %1408 = vmatpush1.msra.mxu0 %v1384
        %1409 = vmatprep.subr.mxu0 0.0
        %1410 = vmatpush1.msra.mxu0 %v1385
        %1411 = vmatprep.subr.mxu0 0.0
        %1412 = vmatpush1.msra.mxu0 %v1386
        %1413 = vmatprep.subr.mxu0 0.0
        %1414 = vmatpush1.msra.mxu0 %v1387
        %1415 = vmatprep.subr.mxu0 0.0
        %1416 = vmatpush1.msra.mxu0 %v1388
        %1417 = vmatprep.subr.mxu0 0.0
        %1418 = vmatpush1.msra.mxu0 %v1389
        %1419 = vmatprep.subr.mxu0 0.0
        %1420 = vmatpush1.msra.mxu0 %v1390
        %1421 = vmatprep.subr.mxu0 0.0
        %1422 = vmatpush1.msra.mxu0 %v1391
        %1423 = vmatprep.subr.mxu0 0.0
        %1424 = vmatpush1.msra.mxu0 %v1392
        %1425 = vmatprep.subr.mxu0 0.0
        %1426 = vmatpush1.msra.mxu0 0.0
        %1427 = vmatprep.subr.mxu0 0.0
        %1428 = vmatpush1.msra.mxu0 0.0
        %1429 = vmatprep.subr.mxu0 0.0
        %1430 = vmatpush1.msra.mxu0 0.0
        %1431 = vmatprep.subr.mxu0 0.0
        %1432 = vmatpush1.msra.mxu0 0.0
        %1433 = vmatprep.subr.mxu0 0.0
        %1434 = vmatpush1.msra.mxu0 0.0
        %1435 = vmatprep.subr.mxu0 0.0
        %1436 = vmatpush1.msra.mxu0 0.0
        %1437 = vmatprep.subr.mxu0 0.0
        %1438 = vmatpush1.msra.mxu0 0.0
        %1439 = vmatprep.subr.mxu0 0.0
        %1440 = vmatpush1.msra.mxu0 0.0
        %1441 = vmatprep.subr.mxu0 0.0
        %1442 = vmatpush1.msra.mxu0 0.0
        %1443 = vmatprep.subr.mxu0 0.0
        %1444 = vmatpush1.msra.mxu0 0.0
        %1445 = vmatprep.subr.mxu0 0.0
        %1446 = vmatpush1.msra.mxu0 0.0
        %1447 = vmatprep.subr.mxu0 0.0
        %1448 = vmatpush1.msra.mxu0 0.0
        %1449 = vmatprep.subr.mxu0 0.0
        %1450 = vmatpush1.msra.mxu0 0.0
        %1451 = vmatprep.subr.mxu0 0.0
        %1452 = vmatpush1.msra.mxu0 0.0
        %1453 = vmatprep.subr.mxu0 0.0
        %1454 = vmatpush1.msra.mxu0 0.0
        %1455 = vmatprep.subr.mxu0 0.0
        %1456 = vmatpush1.msra.mxu0 0.0
        %1457 = vmatprep.mubr.f32.mxu0 0.0
        %1458 = vmatmul.mubr.f32.gmra.mrb[0].mxu0 %v600
        %v1459 = vpop.f32.mrb[0].mxu0
        %v1460 = vadd.f32 0.0, %v1459
        %v1461 = vpop.f32.mrb[0].mxu0
        %1462 = vmatprep.mubr.f32.mxu0 0.0
        %1463 = vmatmul.mubr.f32.gmra.mrb[0].mxu0 %v601
        %v1464 = vpop.f32.mrb[0].mxu0
        %v1465 = vadd.f32 0.0, %v1464
        %v1466 = vpop.f32.mrb[0].mxu0
        %1467 = vmatprep.mubr.f32.mxu0 0.0
        %1468 = vmatmul.mubr.f32.gmra.mrb[0].mxu0 %v602
        %v1469 = vpop.f32.mrb[0].mxu0
        %v1470 = vadd.f32 0.0, %v1469
        %v1471 = vpop.f32.mrb[0].mxu0
        %1472 = vmatprep.mubr.f32.mxu0 0.0
        %1473 = vmatmul.mubr.f32.gmra.mrb[0].mxu0 %v603
        %v1474 = vpop.f32.mrb[0].mxu0
        %v1475 = vadd.f32 0.0, %v1474
        %v1476 = vpop.f32.mrb[0].mxu0
        %1477 = vdwg.mxu0
        %v1478 = vadd.f32 %v1372, %v1460
        %v1479 = vadd.f32 %v1373, %v1465
        %v1480 = vadd.f32 %v1374, %v1470
        %v1481 = vadd.f32 %v1375, %v1475
        %s1482 = scalar_lea.vmem [#allocation2], 1024
        %v1483 = vld [vmem:[%s1482] sm:$0xff]
        %v1484 = vld [vmem:[%s1482 + $0x8] sm:$0xff]
        %v1485 = vld [vmem:[%s1482 + $0x10] sm:$0xff]
        %v1486 = vld [vmem:[%s1482 + $0x18] sm:$0xff]
        %v1487 = vld [vmem:[%s1482 + $0x20] sm:$0xff]
        %v1488 = vld [vmem:[%s1482 + $0x28] sm:$0xff]
        %v1489 = vld [vmem:[%s1482 + $0x30] sm:$0xff]
        %v1490 = vld [vmem:[%s1482 + $0x38] sm:$0xff]
        %v1491 = vld [vmem:[%s1482 + $0x40] sm:$0xff]
        %v1492 = vld [vmem:[%s1482 + $0x48] sm:$0xff]
        %v1493 = vld [vmem:[%s1482 + $0x50] sm:$0xff]
        %v1494 = vld [vmem:[%s1482 + $0x58] sm:$0xff]
        %v1495 = vld [vmem:[%s1482 + $0x60] sm:$0xff]
        %v1496 = vld [vmem:[%s1482 + $0x68] sm:$0xff]
        %v1497 = vld [vmem:[%s1482 + $0x70] sm:$0xff]
        %v1498 = vld [vmem:[%s1482 + $0x78] sm:$0xff]
        %1499 = vmatprep.subr.mxu0 0.0
        %1500 = vmatpush1.msra.mxu0 %v1483
        %1501 = vmatprep.subr.mxu0 0.0
        %1502 = vmatpush1.msra.mxu0 %v1484
        %1503 = vmatprep.subr.mxu0 0.0
        %1504 = vmatpush1.msra.mxu0 %v1485
        %1505 = vmatprep.subr.mxu0 0.0
        %1506 = vmatpush1.msra.mxu0 %v1486
        %1507 = vmatprep.subr.mxu0 0.0
        %1508 = vmatpush1.msra.mxu0 %v1487
        %1509 = vmatprep.subr.mxu0 0.0
        %1510 = vmatpush1.msra.mxu0 %v1488
        %1511 = vmatprep.subr.mxu0 0.0
        %1512 = vmatpush1.msra.mxu0 %v1489
        %1513 = vmatprep.subr.mxu0 0.0
        %1514 = vmatpush1.msra.mxu0 %v1490
        %1515 = vmatprep.subr.mxu0 0.0
        %1516 = vmatpush1.msra.mxu0 %v1491
        %1517 = vmatprep.subr.mxu0 0.0
        %1518 = vmatpush1.msra.mxu0 %v1492
        %1519 = vmatprep.subr.mxu0 0.0
        %1520 = vmatpush1.msra.mxu0 %v1493
        %1521 = vmatprep.subr.mxu0 0.0
        %1522 = vmatpush1.msra.mxu0 %v1494
        %1523 = vmatprep.subr.mxu0 0.0
        %1524 = vmatpush1.msra.mxu0 %v1495
        %1525 = vmatprep.subr.mxu0 0.0
        %1526 = vmatpush1.msra.mxu0 %v1496
        %1527 = vmatprep.subr.mxu0 0.0
        %1528 = vmatpush1.msra.mxu0 %v1497
        %1529 = vmatprep.subr.mxu0 0.0
        %1530 = vmatpush1.msra.mxu0 %v1498
        %1531 = vmatprep.subr.mxu0 0.0
        %1532 = vmatpush1.msra.mxu0 0.0
        %1533 = vmatprep.subr.mxu0 0.0
        %1534 = vmatpush1.msra.mxu0 0.0
        %1535 = vmatprep.subr.mxu0 0.0
        %1536 = vmatpush1.msra.mxu0 0.0
        %1537 = vmatprep.subr.mxu0 0.0
        %1538 = vmatpush1.msra.mxu0 0.0
        %1539 = vmatprep.subr.mxu0 0.0
        %1540 = vmatpush1.msra.mxu0 0.0
        %1541 = vmatprep.subr.mxu0 0.0
        %1542 = vmatpush1.msra.mxu0 0.0
        %1543 = vmatprep.subr.mxu0 0.0
        %1544 = vmatpush1.msra.mxu0 0.0
        %1545 = vmatprep.subr.mxu0 0.0
        %1546 = vmatpush1.msra.mxu0 0.0
        %1547 = vmatprep.subr.mxu0 0.0
        %1548 = vmatpush1.msra.mxu0 0.0
        %1549 = vmatprep.subr.mxu0 0.0
        %1550 = vmatpush1.msra.mxu0 0.0
        %1551 = vmatprep.subr.mxu0 0.0
        %1552 = vmatpush1.msra.mxu0 0.0
        %1553 = vmatprep.subr.mxu0 0.0
        %1554 = vmatpush1.msra.mxu0 0.0
        %1555 = vmatprep.subr.mxu0 0.0
        %1556 = vmatpush1.msra.mxu0 0.0
        %1557 = vmatprep.subr.mxu0 0.0
        %1558 = vmatpush1.msra.mxu0 0.0
        %1559 = vmatprep.subr.mxu0 0.0
        %1560 = vmatpush1.msra.mxu0 0.0
        %1561 = vmatprep.subr.mxu0 0.0
        %1562 = vmatpush1.msra.mxu0 0.0
        %1563 = vmatprep.mubr.f32.mxu0 0.0
        %1564 = vmatmul.mubr.f32.gmra.mrb[0].mxu0 %v876
        %v1565 = vpop.f32.mrb[0].mxu0
        %v1566 = vadd.f32 0.0, %v1565
        %v1567 = vpop.f32.mrb[0].mxu0
        %1568 = vmatprep.mubr.f32.mxu0 0.0
        %1569 = vmatmul.mubr.f32.gmra.mrb[0].mxu0 %v877
        %v1570 = vpop.f32.mrb[0].mxu0
        %v1571 = vadd.f32 0.0, %v1570
        %v1572 = vpop.f32.mrb[0].mxu0
        %1573 = vmatprep.mubr.f32.mxu0 0.0
        %1574 = vmatmul.mubr.f32.gmra.mrb[0].mxu0 %v878
        %v1575 = vpop.f32.mrb[0].mxu0
        %v1576 = vadd.f32 0.0, %v1575
        %v1577 = vpop.f32.mrb[0].mxu0
        %1578 = vmatprep.mubr.f32.mxu0 0.0
        %1579 = vmatmul.mubr.f32.gmra.mrb[0].mxu0 %v879
        %v1580 = vpop.f32.mrb[0].mxu0
        %v1581 = vadd.f32 0.0, %v1580
        %v1582 = vpop.f32.mrb[0].mxu0
        %1583 = vdwg.mxu0
        %v1584 = vadd.f32 %v1478, %v1566
        %v1585 = vadd.f32 %v1479, %v1571
        %v1586 = vadd.f32 %v1480, %v1576
        %v1587 = vadd.f32 %v1481, %v1581
        %s1588 = scalar_lea.vmem [#allocation2], 1152
        %v1589 = vld [vmem:[%s1588] sm:$0xff]
        %v1590 = vld [vmem:[%s1588 + $0x8] sm:$0xff]
        %v1591 = vld [vmem:[%s1588 + $0x10] sm:$0xff]
        %v1592 = vld [vmem:[%s1588 + $0x18] sm:$0xff]
        %v1593 = vld [vmem:[%s1588 + $0x20] sm:$0xff]
        %v1594 = vld [vmem:[%s1588 + $0x28] sm:$0xff]
        %v1595 = vld [vmem:[%s1588 + $0x30] sm:$0xff]
        %v1596 = vld [vmem:[%s1588 + $0x38] sm:$0xff]
        %v1597 = vld [vmem:[%s1588 + $0x40] sm:$0xff]
        %v1598 = vld [vmem:[%s1588 + $0x48] sm:$0xff]
        %v1599 = vld [vmem:[%s1588 + $0x50] sm:$0xff]
        %v1600 = vld [vmem:[%s1588 + $0x58] sm:$0xff]
        %v1601 = vld [vmem:[%s1588 + $0x60] sm:$0xff]
        %v1602 = vld [vmem:[%s1588 + $0x68] sm:$0xff]
        %v1603 = vld [vmem:[%s1588 + $0x70] sm:$0xff]
        %v1604 = vld [vmem:[%s1588 + $0x78] sm:$0xff]
        %1605 = vmatprep.subr.mxu0 0.0
        %1606 = vmatpush1.msra.mxu0 %v1589
        %1607 = vmatprep.subr.mxu0 0.0
        %1608 = vmatpush1.msra.mxu0 %v1590
        %1609 = vmatprep.subr.mxu0 0.0
        %1610 = vmatpush1.msra.mxu0 %v1591
        %1611 = vmatprep.subr.mxu0 0.0
        %1612 = vmatpush1.msra.mxu0 %v1592
        %1613 = vmatprep.subr.mxu0 0.0
        %1614 = vmatpush1.msra.mxu0 %v1593
        %1615 = vmatprep.subr.mxu0 0.0
        %1616 = vmatpush1.msra.mxu0 %v1594
        %1617 = vmatprep.subr.mxu0 0.0
        %1618 = vmatpush1.msra.mxu0 %v1595
        %1619 = vmatprep.subr.mxu0 0.0
        %1620 = vmatpush1.msra.mxu0 %v1596
        %1621 = vmatprep.subr.mxu0 0.0
        %1622 = vmatpush1.msra.mxu0 %v1597
        %1623 = vmatprep.subr.mxu0 0.0
        %1624 = vmatpush1.msra.mxu0 %v1598
        %1625 = vmatprep.subr.mxu0 0.0
        %1626 = vmatpush1.msra.mxu0 %v1599
        %1627 = vmatprep.subr.mxu0 0.0
        %1628 = vmatpush1.msra.mxu0 %v1600
        %1629 = vmatprep.subr.mxu0 0.0
        %1630 = vmatpush1.msra.mxu0 %v1601
        %1631 = vmatprep.subr.mxu0 0.0
        %1632 = vmatpush1.msra.mxu0 %v1602
        %1633 = vmatprep.subr.mxu0 0.0
        %1634 = vmatpush1.msra.mxu0 %v1603
        %1635 = vmatprep.subr.mxu0 0.0
        %1636 = vmatpush1.msra.mxu0 %v1604
        %1637 = vmatprep.subr.mxu0 0.0
        %1638 = vmatpush1.msra.mxu0 0.0
        %1639 = vmatprep.subr.mxu0 0.0
        %1640 = vmatpush1.msra.mxu0 0.0
        %1641 = vmatprep.subr.mxu0 0.0
        %1642 = vmatpush1.msra.mxu0 0.0
        %1643 = vmatprep.subr.mxu0 0.0
        %1644 = vmatpush1.msra.mxu0 0.0
        %1645 = vmatprep.subr.mxu0 0.0
        %1646 = vmatpush1.msra.mxu0 0.0
        %1647 = vmatprep.subr.mxu0 0.0
        %1648 = vmatpush1.msra.mxu0 0.0
        %1649 = vmatprep.subr.mxu0 0.0
        %1650 = vmatpush1.msra.mxu0 0.0
        %1651 = vmatprep.subr.mxu0 0.0
        %1652 = vmatpush1.msra.mxu0 0.0
        %1653 = vmatprep.subr.mxu0 0.0
        %1654 = vmatpush1.msra.mxu0 0.0
        %1655 = vmatprep.subr.mxu0 0.0
        %1656 = vmatpush1.msra.mxu0 0.0
        %1657 = vmatprep.subr.mxu0 0.0
        %1658 = vmatpush1.msra.mxu0 0.0
        %1659 = vmatprep.subr.mxu0 0.0
        %1660 = vmatpush1.msra.mxu0 0.0
        %1661 = vmatprep.subr.mxu0 0.0
        %1662 = vmatpush1.msra.mxu0 0.0
        %1663 = vmatprep.subr.mxu0 0.0
        %1664 = vmatpush1.msra.mxu0 0.0
        %1665 = vmatprep.subr.mxu0 0.0
        %1666 = vmatpush1.msra.mxu0 0.0
        %1667 = vmatprep.subr.mxu0 0.0
        %1668 = vmatpush1.msra.mxu0 0.0
        %1669 = vmatprep.mubr.f32.mxu0 0.0
        %1670 = vmatmul.mubr.f32.gmra.mrb[0].mxu0 %v1258
        %v1671 = vpop.f32.mrb[0].mxu0
        %v1672 = vadd.f32 0.0, %v1671
        %v1673 = vpop.f32.mrb[0].mxu0
        %1674 = vmatprep.mubr.f32.mxu0 0.0
        %1675 = vmatmul.mubr.f32.gmra.mrb[0].mxu0 %v1259
        %v1676 = vpop.f32.mrb[0].mxu0
        %v1677 = vadd.f32 0.0, %v1676
        %v1678 = vpop.f32.mrb[0].mxu0
        %1679 = vmatprep.mubr.f32.mxu0 0.0
        %1680 = vmatmul.mubr.f32.gmra.mrb[0].mxu0 %v1260
        %v1681 = vpop.f32.mrb[0].mxu0
        %v1682 = vadd.f32 0.0, %v1681
        %v1683 = vpop.f32.mrb[0].mxu0
        %1684 = vmatprep.mubr.f32.mxu0 0.0
        %1685 = vmatmul.mubr.f32.gmra.mrb[0].mxu0 %v1261
        %v1686 = vpop.f32.mrb[0].mxu0
        %v1687 = vadd.f32 0.0, %v1686
        %v1688 = vpop.f32.mrb[0].mxu0
        %1689 = vdwg.mxu0
        %v1690 = vadd.f32 %v1584, %v1672
        %v1691 = vadd.f32 %v1585, %v1677
        %v1692 = vadd.f32 %v1586, %v1682
        %v1693 = vadd.f32 %v1587, %v1687
        %vm1694 = vcmp.gt.f32.partialorder %v1690, 20.0
        %vm1695 = vcmp.gt.f32.partialorder %v1691, 20.0
        %vm1696 = vcmp.gt.f32.partialorder %v1692, 20.0
        %vm1697 = vcmp.gt.f32.partialorder %v1693, 20.0
        %v1698 = vmin.f32 %v1690, 20.0
        %v1699 = vmin.f32 %v1691, 20.0
        %v1700 = vmin.f32 %v1692, 20.0
        %v1701 = vmin.f32 %v1693, 20.0
        %v1702 = vmul.f32 %v1698, 1.442695
        %v1703 = vpow.pop %v1702
        %v1704 = vmul.f32 %v1699, 1.442695
        %v1705 = vpow.pop %v1704
        %v1706 = vmul.f32 %v1700, 1.442695
        %v1707 = vpow.pop %v1706
        %v1708 = vmul.f32 %v1701, 1.442695
        %v1709 = vpow.pop %v1708
        %v1710 = vadd.f32 %v1703, 1.0
        %v1711 = vlog2.pop %v1710
        %v1712 = vmul.f32 %v1711, 0.6931472
        %v1713 = vmul.f32 -0.5, %v1703
        %v1714 = vadd.f32 %v1713, 1.0
        %v1715 = vmul.f32 %v1714, %v1703
        %v1716 = vand.u32 2147483647, %v1703
        %vm1717 = vcmp.lt.f32.partialorder %v1716, 0.0004427343
        %v1718 = vsel %vm1717, %v1715, %v1712
        %v1719 = vadd.f32 %v1705, 1.0
        %v1720 = vlog2.pop %v1719
        %v1721 = vmul.f32 %v1720, 0.6931472
        %v1722 = vmul.f32 -0.5, %v1705
        %v1723 = vadd.f32 %v1722, 1.0
        %v1724 = vmul.f32 %v1723, %v1705
        %v1725 = vand.u32 2147483647, %v1705
        %vm1726 = vcmp.lt.f32.partialorder %v1725, 0.0004427343
        %v1727 = vsel %vm1726, %v1724, %v1721
        %v1728 = vadd.f32 %v1707, 1.0
        %v1729 = vlog2.pop %v1728
        %v1730 = vmul.f32 %v1729, 0.6931472
        %v1731 = vmul.f32 -0.5, %v1707
        %v1732 = vadd.f32 %v1731, 1.0
        %v1733 = vmul.f32 %v1732, %v1707
        %v1734 = vand.u32 2147483647, %v1707
        %vm1735 = vcmp.lt.f32.partialorder %v1734, 0.0004427343
        %v1736 = vsel %vm1735, %v1733, %v1730
        %v1737 = vadd.f32 %v1709, 1.0
        %v1738 = vlog2.pop %v1737
        %v1739 = vmul.f32 %v1738, 0.6931472
        %v1740 = vmul.f32 -0.5, %v1709
        %v1741 = vadd.f32 %v1740, 1.0
        %v1742 = vmul.f32 %v1741, %v1709
        %v1743 = vand.u32 2147483647, %v1709
        %vm1744 = vcmp.lt.f32.partialorder %v1743, 0.0004427343
        %v1745 = vsel %vm1744, %v1742, %v1739
        %v1746 = vsel %vm1694, %v1690, %v1718
        %v1747 = vsel %vm1695, %v1691, %v1727
        %v1748 = vsel %vm1696, %v1692, %v1736
        %v1749 = vsel %vm1697, %v1693, %v1745
        %v1750 = vld [vmem:[%s5] sm:$0x1]
        %v1752 = vlaneseq
        %v1753 = vshrl.u32 %v1752, 7
        %v1754 = vsub.s32 0, %v1753
        %v1755 = vrot.slane %v1750, %v1754
        %v1757 = vmul.f32 %v432, %v1755
        %v1758 = vmul.f32 %v433, %v1755
        %v1759 = vmul.f32 %v434, %v1755
        %v1760 = vmul.f32 %v435, %v1755
        %s1761 = scalar_lea.vmem %s5, 1
        %v1762 = vld [vmem:[%s1761] sm:$0x1]
        %v1764 = vlaneseq
        %v1765 = vshrl.u32 %v1764, 7
        %v1766 = vsub.s32 0, %v1765
        %v1767 = vrot.slane %v1762, %v1766
        %v1769 = vmul.f32 %v600, %v1767
        %v1770 = vmul.f32 %v601, %v1767
        %v1771 = vmul.f32 %v602, %v1767
        %v1772 = vmul.f32 %v603, %v1767
        %v1773 = vadd.f32 %v1757, %v1769
        %v1774 = vadd.f32 %v1758, %v1770
        %v1775 = vadd.f32 %v1759, %v1771
        %v1776 = vadd.f32 %v1760, %v1772
        %s1777 = scalar_lea.vmem %s5, 2
        %v1778 = vld [vmem:[%s1777] sm:$0x1]
        %v1780 = vlaneseq
        %v1781 = vshrl.u32 %v1780, 7
        %v1782 = vsub.s32 0, %v1781
        %v1783 = vrot.slane %v1778, %v1782
        %v1785 = vmul.f32 %v876, %v1783
        %v1786 = vmul.f32 %v877, %v1783
        %v1787 = vmul.f32 %v878, %v1783
        %v1788 = vmul.f32 %v879, %v1783
        %v1789 = vadd.f32 %v1773, %v1785
        %v1790 = vadd.f32 %v1774, %v1786
        %v1791 = vadd.f32 %v1775, %v1787
        %v1792 = vadd.f32 %v1776, %v1788
        %s1793 = scalar_lea.vmem %s5, 3
        %v1794 = vld [vmem:[%s1793] sm:$0x1]
        %v1796 = vlaneseq
        %v1797 = vshrl.u32 %v1796, 7
        %v1798 = vsub.s32 0, %v1797
        %v1799 = vrot.slane %v1794, %v1798
        %v1801 = vmul.f32 %v1258, %v1799
        %v1802 = vmul.f32 %v1259, %v1799
        %v1803 = vmul.f32 %v1260, %v1799
        %v1804 = vmul.f32 %v1261, %v1799
        %v1805 = vadd.f32 %v1789, %v1801
        %v1806 = vadd.f32 %v1790, %v1802
        %v1807 = vadd.f32 %v1791, %v1803
        %v1808 = vadd.f32 %v1792, %v1804
        %s1809 = scalar_lea.vmem %s5, 4
        %v1810 = vld [vmem:[%s1809] sm:$0x1]
        %v1812 = vlaneseq
        %v1813 = vshrl.u32 %v1812, 7
        %v1814 = vsub.s32 0, %v1813
        %v1815 = vrot.slane %v1810, %v1814
        %v1817 = vmul.f32 %v1746, %v1815
        %v1818 = vmul.f32 %v1747, %v1815
        %v1819 = vmul.f32 %v1748, %v1815
        %v1820 = vmul.f32 %v1749, %v1815
        %v1821 = vadd.f32 %v1805, %v1817
        %v1822 = vadd.f32 %v1806, %v1818
        %v1823 = vadd.f32 %v1807, %v1819
        %v1824 = vadd.f32 %v1808, %v1820
        %1825 = vst [vmem:[%s260] sm:$0xff] %v1821
        %1826 = vst [vmem:[%s260 + $0x8] sm:$0xff] %v1822
        %1827 = vst [vmem:[%s260 + $0x10] sm:$0xff] %v1823
        %1828 = vst [vmem:[%s260 + $0x18] sm:$0xff] %v1824
        %s1829 = sand.u32 %s160, 1
        %s1830 = scalar_lea.sflag [#allocation4], %s1829
        %s1831 = sand.u32 %s160, 1
        %s1832 = smul.addr %s1831, 32
        %s1833 = scalar_lea.vmem [#allocation5], %s1832
        // Predicated region
        $region49: #{tpu_custom_call.1} parent=43 // pred_check
          %p1834 = pneg %p170
        $region50: #{tpu_custom_call.1} parent=43 // pred_check_branch
          %1836 = sbr.rel (%p1834) target = $region52
        $region51: #{tpu_custom_call.1} parent=43 // pred_region
          %s1837 = smul.u32 4, %s21
          %s1839 = ssub.s32 512, 512
          %1840 = vsyncadd %s1830, %s1839
          %s1841 = smul.addr %s1837, 128
          %s1842 = scalar_lea.hbm %s6, %s1841
          %s1843 = sshll.u32 %s1833, 4
          %s1844 = int_to_ptr.vmem [resolvable:$true] %s1843
          %1849 = dma.vmem_to_hbm [thread:$0]  %s1844, 512, %s1842, %s1830, 128, 128, 8
        $region52: #{tpu_custom_call.1} parent=43 // pred_fallthru
          _
      $region44: #{tpu_custom_call.1} parent=5 // pred_fallthru
        _
      %p1850 = scmp.le.s32.totalorder 2, %s16
      // Predicated region
      $region53: #{tpu_custom_call.1} parent=5 // pred_check
        %p1851 = pneg %p1850
      $region54: #{tpu_custom_call.1} parent=5 // pred_check_branch
        %1853 = sbr.rel (%p1851) target = $region56
      $region55: #{tpu_custom_call.1} parent=5 // pred_region
        %s1854 = ssub.s32 %s16, 2
        // Predicated region
        $region57: #{tpu_custom_call.1} parent=55 // pred_check
          %p1855 = pneg %p176
        $region58: #{tpu_custom_call.1} parent=55 // pred_check_branch
          %1857 = sbr.rel (%p1855) target = $region60
        $region59: #{tpu_custom_call.1} parent=55 // pred_region
          %s1858 = sand.u32 %s161, 1
          %s1859 = scalar_lea.sflag [#allocation4], %s1858
          %s1860 = sand.u32 %s161, 1
          %s1861 = smul.addr %s1860, 32
          %s1862 = scalar_lea.vmem [#allocation5], %s1861
          %1863 = dma.done %s1859, 512
        $region60: #{tpu_custom_call.1} parent=55 // pred_fallthru
          _
      $region56: #{tpu_custom_call.1} parent=5 // pred_fallthru
        _
    $region6: #{tpu_custom_call.1} parent=1 // loop_footer
      %s20 = sadd.s32 1, %s16
    $region7: #{tpu_custom_call.1} parent=1 // loop_footer_branch
      %15 = sbr.rel target = $region3
    $region8: #{tpu_custom_call.1} parent=1 // loop_exit
      _
    %1864 = vsyncpa [#allocation3], 1
    %s1865 = scalar_lea.sflag [#allocation3], 1
    %1866 = vsyncpa %s1865, 1
    %1867 = vsyncpa [#allocation4], 1
    %s1868 = scalar_lea.sflag [#allocation4], 1
    %1869 = vsyncpa %s1868, 1

</llo_original>
